<compile_context>
chip_gen: v7x
topology: tpu7x:2x2x1
jax: 0.10.0
libtpu: 0.0.40
codegen_flags: <defaults>
</compile_context>

<pallas_src>
import math

import jax
import jax.numpy as jnp
from jax.experimental import pallas as pl
from jax.experimental.pallas import tpu as pltpu


def _flash_self_attn_kernel(q_ref, k_ref, v_ref, mask_ref,
                            wq_ref, wk_ref, wv_ref, wfc_ref, bfc_ref,
                            o_ref,
                            qp_ref, m_ref, l_ref, acc_ref):
    """grid = (batch, q_tiles, k_tiles); online softmax along the k axis.

    Blocks: q (1,H,Tq,D) bf16 | k/v (1,H,Tk,D) bf16 | mask (1,H,Tq,Tk) int8
            wq/wk/wv (H,D,D) bf16 | wfc (H,D,E) bf16 | bias (1,E) f32
            out (1,Tq,E) bf16
    Scratch: qp (H,Tq,D) bf16 | m,l (H,Tq,1) f32 | acc (H,Tq,D) f32
    """
    f32 = jnp.float32
    bf16 = jnp.bfloat16
    ki = pl.program_id(2)

    # dot_general dimension numbers — head is the batch dim everywhere.
    proj_dims = (((2,), (1,)), ((0,), (0,)))   # (H,T,D)  x (H,D,D)  -> (H,T,D)
    qk_dims = (((2,), (2,)), ((0,), (0,)))     # (H,Tq,D) x (H,Tk,D) -> (H,Tq,Tk)
    pv_dims = (((2,), (1,)), ((0,), (0,)))     # (H,Tq,Tk)x (H,Tk,D) -> (H,Tq,D)
    fc_dims = (((2,), (1,)), ((0,), (0,)))     # (H,Tq,D) x (H,D,E)  -> (H,Tq,E)

    @pl.when(ki == 0)
    def _init():
        # Project this Q tile once per (batch, q-tile); 1/sqrt(E) is already
        # folded into Wq on the host.
        qp_ref[...] = jax.lax.dot_general(
            q_ref[0], wq_ref[...], proj_dims,
            preferred_element_type=f32).astype(bf16)
        m_ref[...] = jnp.full(m_ref.shape, -jnp.inf, f32)
        l_ref[...] = jnp.zeros(l_ref.shape, f32)
        acc_ref[...] = jnp.zeros(acc_ref.shape, f32)

    # Project the current K/V tile.
    # TODO(synk): when L grows enough that q_tiles > 1, hoist the K/V
    # projections into a separate pass (or cache them) so they are not
    # recomputed once per q tile.
    kp = jax.lax.dot_general(k_ref[0], wk_ref[...], proj_dims,
                             preferred_element_type=f32).astype(bf16)
    vp = jax.lax.dot_general(v_ref[0], wv_ref[...], proj_dims,
                             preferred_element_type=f32).astype(bf16)

    # Scaled logits for this (q-tile, k-tile) pair; mask where mask == 0.
    s = jax.lax.dot_general(qp_ref[...], kp, qk_dims,
                            preferred_element_type=f32)          # (H,Tq,Tk) f32
    maskf = mask_ref[0].astype(f32)           # int8 -> f32 (dequant-style upcast)
    s = jnp.where(maskf == 0.0, f32(-1e20), s)

    # Online softmax update (statistics stay f32 on all chip generations).
    m_prev = m_ref[...]
    m_new = jnp.maximum(m_prev, jnp.max(s, axis=-1, keepdims=True))
    alpha = jnp.exp(m_prev - m_new)
    p = jnp.exp(s - m_new)
    l_ref[...] = alpha * l_ref[...] + jnp.sum(p, axis=-1, keepdims=True)
    acc_ref[...] = alpha * acc_ref[...] + jax.lax.dot_general(
        p.astype(bf16), vp, pv_dims, preferred_element_type=f32)
    m_ref[...] = m_new

    @pl.when(ki == pl.num_programs(2) - 1)
    def _finalize():
        inv_l = pl.reciprocal(l_ref[...], approx=True)
        ctx = (acc_ref[...] * inv_l).astype(bf16)                 # (H,Tq,D)
        # fc_out folded per head:
        #   concat_h(ctx_h) @ Wfc.T == sum_h ctx_h @ Wfc.T[h*D:(h+1)*D, :]
        per_head = jax.lax.dot_general(ctx, wfc_ref[...], fc_dims,
                                       preferred_element_type=f32)  # (H,Tq,E)
        out = jnp.sum(per_head, axis=0) + bfc_ref[...]             # (Tq,E) f32
        o_ref[0] = out.astype(o_ref.dtype)


def _pick_tile(L):
    # 256-multiples fill the 256-wide MXU on v6e/v7x; 128 suits v5e; otherwise
    # take the whole (small / irregular) axis so block == full dim stays legal.
    for t in (256, 128):
        if L % t == 0:
            return t
    return L


def _vmem_limit_bytes():
    # ~7/8 of physical VMEM per core, capped at 112 MiB:
    # ~56 MiB on v7x (64 MiB/TC), ~112 MiB on v5e/v6e (128 MiB physical).
    try:
        cap = pltpu.get_tpu_info().vmem_capacity_bytes
    except Exception:
        cap = 64 * 1024 * 1024
    return int(min(cap * 7 // 8, 112 * 1024 * 1024))


def self_attention_pallas(values, keys, query, mask, params, embed_size, heads):
    """Pallas implementation of SelfAttention.forward.

    values/keys/query: (B, L, embed_size) float32
    mask:              (B, heads, L, L)   (0 => masked)
    Returns:           (B, L, embed_size) bfloat16
    """
    B, L, E = query.shape
    H = heads
    D = embed_size // heads
    assert D * H == embed_size and E == embed_size

    scale = 1.0 / math.sqrt(float(embed_size))

    # ---- one-time host-side prep -----------------------------------------
    # (B, L, E) -> (B, H, L, D): head becomes a dot_general batch dim, so the
    # kernel never slices sub-128-lane per-head windows.
    def to_heads(x):
        return x.reshape(B, L, H, D).transpose(0, 2, 1, 3).astype(jnp.bfloat16)

    q_h, k_h, v_h = to_heads(query), to_heads(keys), to_heads(values)

    # Mask as int8 (4x less HBM traffic / VMEM than f32); keep/mask preserved.
    mask_i8 = (mask != 0).astype(jnp.int8)

    # Shared per-head (D, D) projection weights (PyTorch (out,in) layout ->
    # pre-transposed), broadcast over heads; softmax scale folded into Wq.
    def tile_w(w, s=1.0):
        return jnp.broadcast_to((w.T * s)[None], (H, D, D)).astype(jnp.bfloat16)

    wq_t = tile_w(params["wq"], scale)
    wk_t = tile_w(params["wk"])
    wv_t = tile_w(params["wv"])
    wfc_r = params["wfc"].T.reshape(H, D, E).astype(jnp.bfloat16)   # (H, D, E)
    bfc = params["bfc"].reshape(1, E).astype(jnp.float32)

    # ---- tiling ------------------------------------------------------------
    TQ = _pick_tile(L)
    TK = _pick_tile(L)
    grid = (B, L // TQ, L // TK)

    # NOTE: the four weight inputs and the bias have constant index maps; on
    # jax versions where BlockSpec.pipeline_mode is honoured by the TPU
    # lowering they can additionally be marked pl.Buffered(1) to drop their
    # second (useless) pipeline buffer.
    out = pl.pallas_call(
        _flash_self_attn_kernel,
        out_shape=jax.ShapeDtypeStruct((B, L, E), jnp.bfloat16),
        grid_spec=pltpu.PrefetchScalarGridSpec(
            num_scalar_prefetch=0,
            grid=grid,
            in_specs=[
                pl.BlockSpec((1, H, TQ, D), lambda b, qi, ki: (b, 0, qi, 0)),    # q
                pl.BlockSpec((1, H, TK, D), lambda b, qi, ki: (b, 0, ki, 0)),    # k
                pl.BlockSpec((1, H, TK, D), lambda b, qi, ki: (b, 0, ki, 0)),    # v
                pl.BlockSpec((1, H, TQ, TK), lambda b, qi, ki: (b, 0, qi, ki)),  # mask
                pl.BlockSpec((H, D, D), lambda b, qi, ki: (0, 0, 0)),            # Wq
                pl.BlockSpec((H, D, D), lambda b, qi, ki: (0, 0, 0)),            # Wk
                pl.BlockSpec((H, D, D), lambda b, qi, ki: (0, 0, 0)),            # Wv
                pl.BlockSpec((H, D, E), lambda b, qi, ki: (0, 0, 0)),            # Wfc.T
                pl.BlockSpec((1, E), lambda b, qi, ki: (0, 0)),                  # bias
            ],
            out_specs=pl.BlockSpec((1, TQ, E), lambda b, qi, ki: (b, qi, 0)),
            scratch_shapes=[
                pltpu.VMEM((H, TQ, D), jnp.bfloat16),   # projected Q tile
                pltpu.VMEM((H, TQ, 1), jnp.float32),    # running max  m
                pltpu.VMEM((H, TQ, 1), jnp.float32),    # running sum  l
                pltpu.VMEM((H, TQ, D), jnp.float32),    # running context acc
            ],
        ),
        compiler_params=pltpu.CompilerParams(
            dimension_semantics=("parallel", "parallel", "arbitrary"),
            vmem_limit_bytes=_vmem_limit_bytes(),
        ),
    )(q_h, k_h, v_h, mask_i8, wq_t, wk_t, wv_t, wfc_r, bfc)

    return out


# ---------------------------------------------------------------------------
# Pure-JAX f32 reference (mirrors the PyTorch forward) for verification.
# ---------------------------------------------------------------------------
def self_attention_ref(values, keys, query, mask, params, embed_size, heads):
    B, L, E = query.shape
    H, D = heads, embed_size // heads
    v = values.reshape(B, L, H, D) @ params["wv"].T
    k = keys.reshape(B, L, H, D) @ params["wk"].T
    q = query.reshape(B, L, H, D) @ params["wq"].T
    energy = jnp.einsum("bqhd,bkhd->bhqk", q, k)
    energy = jnp.where(mask == 0, jnp.float32(-1e20), energy)
    attn = jax.nn.softmax(energy / math.sqrt(float(embed_size)), axis=3)
    out = jnp.einsum("bhql,blhd->bqhd", attn, v).reshape(B, L, H * D)
    return out @ params["wfc"].T + params["bfc"]


if __name__ == "__main__":
    B, L = 2, 8
    embed_size, heads = 32, 4
    D = embed_size // heads

    key = jax.random.PRNGKey(0)
    ks = jax.random.split(key, 9)

    # PyTorch Linear weight layout: (out_features, in_features)
    params = {
        "wq": jax.random.normal(ks[0], (D, D), jnp.float32) * 0.1,
        "wk": jax.random.normal(ks[1], (D, D), jnp.float32) * 0.1,
        "wv": jax.random.normal(ks[2], (D, D), jnp.float32) * 0.1,
        "wfc": jax.random.normal(ks[3], (embed_size, embed_size), jnp.float32) * 0.1,
        "bfc": jax.random.normal(ks[4], (embed_size,), jnp.float32) * 0.1,
    }

    values = jax.random.normal(ks[5], (B, L, embed_size), jnp.float32)
    keys_in = jax.random.normal(ks[6], (B, L, embed_size), jnp.float32)
    query = jax.random.normal(ks[7], (B, L, embed_size), jnp.float32)

    # causal mask broadcast over batch/heads (0 => masked)
    causal = jnp.tril(jnp.ones((L, L), jnp.float32))
    mask = jnp.broadcast_to(causal, (B, heads, L, L))

    out = self_attention_pallas(values, keys_in, query, mask, params,
                                embed_size, heads)
    out = jax.block_until_ready(out)

    ref = self_attention_ref(values, keys_in, query, mask, params,
                             embed_size, heads)
    assert out.shape == (B, L, embed_size)
    assert out.dtype == jnp.bfloat16
    # bf16 MXU inputs / bf16 output (f32 accumulation + f32 softmax stats):
    # compare against the f32 reference with a correspondingly loose tolerance.
    err = jnp.max(jnp.abs(out.astype(jnp.float32) - ref))
    assert jnp.allclose(out.astype(jnp.float32), ref, atol=5e-2, rtol=5e-2), float(err)

    print("KERNEL_OK")
</pallas_src>

<mosaic_0001>
module attributes {stable_mosaic.version = 11 : i64} {
  func.func @_flash_self_attn_kernel(%arg0: i32, %arg1: i32, %arg2: i32, %arg3: memref<1x4x8x8xbf16, #tpu.memory_space<vmem>>, %arg4: memref<1x4x8x8xbf16, #tpu.memory_space<vmem>>, %arg5: memref<1x4x8x8xbf16, #tpu.memory_space<vmem>>, %arg6: memref<1x4x8x8xi8, #tpu.memory_space<vmem>>, %arg7: memref<4x8x8xbf16, #tpu.memory_space<vmem>>, %arg8: memref<4x8x8xbf16, #tpu.memory_space<vmem>>, %arg9: memref<4x8x8xbf16, #tpu.memory_space<vmem>>, %arg10: memref<4x8x32xbf16, #tpu.memory_space<vmem>>, %arg11: memref<1x32xf32, #tpu.memory_space<vmem>>, %arg12: memref<1x8x32xbf16, #tpu.memory_space<vmem>>, %arg13: memref<4x8x8xbf16, #tpu.memory_space<vmem>>, %arg14: memref<4x8x1xf32, #tpu.memory_space<vmem>>, %arg15: memref<4x8x1xf32, #tpu.memory_space<vmem>>, %arg16: memref<4x8x8xf32, #tpu.memory_space<vmem>>) attributes {dimension_semantics = [#tpu.dimension_semantics<parallel>, #tpu.dimension_semantics<parallel>, #tpu.dimension_semantics<arbitrary>], iteration_bounds = array<i64: 2, 1, 1>, scalar_prefetch = 0 : i64, scratch_operands = 4 : i64, tpu.core_type = #tpu.core_type<tc>, window_params = [{transform_indices = @transform_0, window_bounds = array<i64: 1, 4, 8, 8>}, {transform_indices = @transform_1, window_bounds = array<i64: 1, 4, 8, 8>}, {transform_indices = @transform_2, window_bounds = array<i64: 1, 4, 8, 8>}, {transform_indices = @transform_3, window_bounds = array<i64: 1, 4, 8, 8>}, {pipeline_mode = #tpu.pipeline_mode<synchronous>, transform_indices = @transform_4, window_bounds = array<i64: 4, 8, 8>}, {pipeline_mode = #tpu.pipeline_mode<synchronous>, transform_indices = @transform_5, window_bounds = array<i64: 4, 8, 8>}, {pipeline_mode = #tpu.pipeline_mode<synchronous>, transform_indices = @transform_6, window_bounds = array<i64: 4, 8, 8>}, {pipeline_mode = #tpu.pipeline_mode<synchronous>, transform_indices = @transform_7, window_bounds = array<i64: 4, 8, 32>}, {pipeline_mode = #tpu.pipeline_mode<synchronous>, transform_indices = @transform_8, window_bounds = array<i64: 1, 32>}, {transform_indices = @transform_9, window_bounds = array<i64: 1, 8, 32>}]} {
    %c0_i32 = arith.constant 0 : i32
    %0 = arith.cmpi eq, %arg2, %c0_i32 : i32
    %1 = arith.extui %0 : i1 to i32
    %c0_i32_0 = arith.constant 0 : i32
    %2 = arith.cmpi ne, %1, %c0_i32_0 : i32
    scf.if %2 {
      %c0_48 = arith.constant 0 : index
      %c0_49 = arith.constant 0 : index
      %c0_50 = arith.constant 0 : index
      %c0_51 = arith.constant 0 : index
      %48 = vector.load %arg3[%c0_48, %c0_49, %c0_50, %c0_51] : memref<1x4x8x8xbf16, #tpu.memory_space<vmem>>, vector<1x4x8x8xbf16>
      %49 = vector.shape_cast %48 : vector<1x4x8x8xbf16> to vector<4x8x8xbf16>
      %c0_52 = arith.constant 0 : index
      %c0_53 = arith.constant 0 : index
      %c0_54 = arith.constant 0 : index
      %50 = vector.load %arg7[%c0_52, %c0_53, %c0_54] : memref<4x8x8xbf16, #tpu.memory_space<vmem>>, vector<4x8x8xbf16>
      %cst_55 = arith.constant dense<0.000000e+00> : vector<4x8x8xf32>
      %51 = tpu.matmul %49, %50, %cst_55 {dimension_numbers = #tpu.dot_dimension_numbers<[2], [1], [1], [2], [0, 0, 0, 1, 1, 2], [0], [0]>} : vector<4x8x8xbf16>, vector<4x8x8xbf16>, vector<4x8x8xf32> -> vector<4x8x8xf32>
      %52 = arith.truncf %51 : vector<4x8x8xf32> to vector<4x8x8xbf16>
      %c0_56 = arith.constant 0 : index
      %c0_57 = arith.constant 0 : index
      %c0_58 = arith.constant 0 : index
      %53 = vector.load %arg13[%c0_56, %c0_57, %c0_58] : memref<4x8x8xbf16, #tpu.memory_space<vmem>>, vector<4x8x8xbf16>
      tpu.vector_store %arg13[%c0_56, %c0_57, %c0_58], %52 {strides = array<i32>} : memref<4x8x8xbf16, #tpu.memory_space<vmem>>, vector<4x8x8xbf16>,
      %cst_59 = arith.constant 0xFF800000 : f32
      %54 = vector.broadcast %cst_59 : f32 to vector<4x8x1xf32>
      %c0_60 = arith.constant 0 : index
      %c0_61 = arith.constant 0 : index
      %c0_62 = arith.constant 0 : index
      %55 = vector.load %arg14[%c0_60, %c0_61, %c0_62] : memref<4x8x1xf32, #tpu.memory_space<vmem>>, vector<4x8x1xf32>
      tpu.vector_store %arg14[%c0_60, %c0_61, %c0_62], %54 {strides = array<i32>} : memref<4x8x1xf32, #tpu.memory_space<vmem>>, vector<4x8x1xf32>,
      %cst_63 = arith.constant 0.000000e+00 : f32
      %56 = vector.broadcast %cst_63 : f32 to vector<4x8x1xf32>
      %c0_64 = arith.constant 0 : index
      %c0_65 = arith.constant 0 : index
      %c0_66 = arith.constant 0 : index
      %57 = vector.load %arg15[%c0_64, %c0_65, %c0_66] : memref<4x8x1xf32, #tpu.memory_space<vmem>>, vector<4x8x1xf32>
      tpu.vector_store %arg15[%c0_64, %c0_65, %c0_66], %56 {strides = array<i32>} : memref<4x8x1xf32, #tpu.memory_space<vmem>>, vector<4x8x1xf32>,
      %cst_67 = arith.constant 0.000000e+00 : f32
      %58 = vector.broadcast %cst_67 : f32 to vector<4x8x8xf32>
      %c0_68 = arith.constant 0 : index
      %c0_69 = arith.constant 0 : index
      %c0_70 = arith.constant 0 : index
      %59 = vector.load %arg16[%c0_68, %c0_69, %c0_70] : memref<4x8x8xf32, #tpu.memory_space<vmem>>, vector<4x8x8xf32>
      tpu.vector_store %arg16[%c0_68, %c0_69, %c0_70], %58 {strides = array<i32>} : memref<4x8x8xf32, #tpu.memory_space<vmem>>, vector<4x8x8xf32>,
    } else {
    }
    %c0 = arith.constant 0 : index
    %c0_1 = arith.constant 0 : index
    %c0_2 = arith.constant 0 : index
    %c0_3 = arith.constant 0 : index
    %3 = vector.load %arg4[%c0, %c0_1, %c0_2, %c0_3] : memref<1x4x8x8xbf16, #tpu.memory_space<vmem>>, vector<1x4x8x8xbf16>
    %4 = vector.shape_cast %3 : vector<1x4x8x8xbf16> to vector<4x8x8xbf16>
    %c0_4 = arith.constant 0 : index
    %c0_5 = arith.constant 0 : index
    %c0_6 = arith.constant 0 : index
    %5 = vector.load %arg8[%c0_4, %c0_5, %c0_6] : memref<4x8x8xbf16, #tpu.memory_space<vmem>>, vector<4x8x8xbf16>
    %cst = arith.constant dense<0.000000e+00> : vector<4x8x8xf32>
    %6 = tpu.matmul %4, %5, %cst {dimension_numbers = #tpu.dot_dimension_numbers<[2], [1], [1], [2], [0, 0, 0, 1, 1, 2], [0], [0]>} : vector<4x8x8xbf16>, vector<4x8x8xbf16>, vector<4x8x8xf32> -> vector<4x8x8xf32>
    %7 = arith.truncf %6 : vector<4x8x8xf32> to vector<4x8x8xbf16>
    %c0_7 = arith.constant 0 : index
    %c0_8 = arith.constant 0 : index
    %c0_9 = arith.constant 0 : index
    %c0_10 = arith.constant 0 : index
    %8 = vector.load %arg5[%c0_7, %c0_8, %c0_9, %c0_10] : memref<1x4x8x8xbf16, #tpu.memory_space<vmem>>, vector<1x4x8x8xbf16>
    %9 = vector.shape_cast %8 : vector<1x4x8x8xbf16> to vector<4x8x8xbf16>
    %c0_11 = arith.constant 0 : index
    %c0_12 = arith.constant 0 : index
    %c0_13 = arith.constant 0 : index
    %10 = vector.load %arg9[%c0_11, %c0_12, %c0_13] : memref<4x8x8xbf16, #tpu.memory_space<vmem>>, vector<4x8x8xbf16>
    %cst_14 = arith.constant dense<0.000000e+00> : vector<4x8x8xf32>
    %11 = tpu.matmul %9, %10, %cst_14 {dimension_numbers = #tpu.dot_dimension_numbers<[2], [1], [1], [2], [0, 0, 0, 1, 1, 2], [0], [0]>} : vector<4x8x8xbf16>, vector<4x8x8xbf16>, vector<4x8x8xf32> -> vector<4x8x8xf32>
    %12 = arith.truncf %11 : vector<4x8x8xf32> to vector<4x8x8xbf16>
    %c0_15 = arith.constant 0 : index
    %c0_16 = arith.constant 0 : index
    %c0_17 = arith.constant 0 : index
    %13 = vector.load %arg13[%c0_15, %c0_16, %c0_17] : memref<4x8x8xbf16, #tpu.memory_space<vmem>>, vector<4x8x8xbf16>
    %cst_18 = arith.constant dense<0.000000e+00> : vector<4x8x8xf32>
    %14 = tpu.matmul %13, %7, %cst_18 {dimension_numbers = #tpu.dot_dimension_numbers<[2], [2], [1], [1], [0, 0, 0, 1, 1, 1], [0], [0]>} : vector<4x8x8xbf16>, vector<4x8x8xbf16>, vector<4x8x8xf32> -> vector<4x8x8xf32>
    %c0_19 = arith.constant 0 : index
    %c0_20 = arith.constant 0 : index
    %c0_21 = arith.constant 0 : index
    %c0_22 = arith.constant 0 : index
    %15 = vector.load %arg6[%c0_19, %c0_20, %c0_21, %c0_22] : memref<1x4x8x8xi8, #tpu.memory_space<vmem>>, vector<1x4x8x8xi8>
    %16 = vector.shape_cast %15 : vector<1x4x8x8xi8> to vector<4x8x8xi8>
    %17 = arith.sitofp %16 : vector<4x8x8xi8> to vector<4x8x8xf32>
    %cst_23 = arith.constant 0.000000e+00 : f32
    %18 = vector.broadcast %cst_23 : f32 to vector<4x8x8xf32>
    %19 = arith.cmpf oeq, %17, %18 : vector<4x8x8xf32>
    %cst_24 = arith.constant -1.000000e+20 : f32
    %20 = vector.broadcast %cst_24 : f32 to vector<4x8x8xf32>
    %21 = arith.select %19, %20, %14 : vector<4x8x8xi1>, vector<4x8x8xf32>
    %c0_25 = arith.constant 0 : index
    %c0_26 = arith.constant 0 : index
    %c0_27 = arith.constant 0 : index
    %22 = vector.load %arg14[%c0_25, %c0_26, %c0_27] : memref<4x8x1xf32, #tpu.memory_space<vmem>>, vector<4x8x1xf32>
    %cst_28 = arith.constant dense<0xFF800000> : vector<4x8xf32>
    %23 = vector.multi_reduction <maximumf>, %21, %cst_28 [2] : vector<4x8x8xf32> to vector<4x8xf32>
    %24 = vector.shape_cast %23 : vector<4x8xf32> to vector<4x8x1xf32>
    %25 = arith.maximumf %22, %24 : vector<4x8x1xf32>
    %26 = arith.subf %22, %25 : vector<4x8x1xf32>
    %27 = math.exp %26 : vector<4x8x1xf32>
    %28 = vector.broadcast %25 : vector<4x8x1xf32> to vector<4x8x8xf32>
    %29 = arith.subf %21, %28 : vector<4x8x8xf32>
    %30 = math.exp %29 : vector<4x8x8xf32>
    %c0_29 = arith.constant 0 : index
    %c0_30 = arith.constant 0 : index
    %c0_31 = arith.constant 0 : index
    %31 = vector.load %arg15[%c0_29, %c0_30, %c0_31] : memref<4x8x1xf32, #tpu.memory_space<vmem>>, vector<4x8x1xf32>
    %32 = arith.mulf %27, %31 : vector<4x8x1xf32>
    %cst_32 = arith.constant dense<0.000000e+00> : vector<4x8xf32>
    %33 = vector.multi_reduction <add>, %30, %cst_32 [2] : vector<4x8x8xf32> to vector<4x8xf32>
    %34 = vector.shape_cast %33 : vector<4x8xf32> to vector<4x8x1xf32>
    %35 = arith.addf %32, %34 : vector<4x8x1xf32>
    %c0_33 = arith.constant 0 : index
    %c0_34 = arith.constant 0 : index
    %c0_35 = arith.constant 0 : index
    %36 = vector.load %arg15[%c0_33, %c0_34, %c0_35] : memref<4x8x1xf32, #tpu.memory_space<vmem>>, vector<4x8x1xf32>
    tpu.vector_store %arg15[%c0_33, %c0_34, %c0_35], %35 {strides = array<i32>} : memref<4x8x1xf32, #tpu.memory_space<vmem>>, vector<4x8x1xf32>,
    %c0_36 = arith.constant 0 : index
    %c0_37 = arith.constant 0 : index
    %c0_38 = arith.constant 0 : index
    %37 = vector.load %arg16[%c0_36, %c0_37, %c0_38] : memref<4x8x8xf32, #tpu.memory_space<vmem>>, vector<4x8x8xf32>
    %38 = vector.broadcast %27 : vector<4x8x1xf32> to vector<4x8x8xf32>
    %39 = arith.mulf %38, %37 : vector<4x8x8xf32>
    %40 = arith.truncf %30 : vector<4x8x8xf32> to vector<4x8x8xbf16>
    %cst_39 = arith.constant dense<0.000000e+00> : vector<4x8x8xf32>
    %41 = tpu.matmul %40, %12, %cst_39 {dimension_numbers = #tpu.dot_dimension_numbers<[2], [1], [1], [2], [0, 0, 0, 1, 1, 2], [0], [0]>} : vector<4x8x8xbf16>, vector<4x8x8xbf16>, vector<4x8x8xf32> -> vector<4x8x8xf32>
    %42 = arith.addf %39, %41 : vector<4x8x8xf32>
    %c0_40 = arith.constant 0 : index
    %c0_41 = arith.constant 0 : index
    %c0_42 = arith.constant 0 : index
    %43 = vector.load %arg16[%c0_40, %c0_41, %c0_42] : memref<4x8x8xf32, #tpu.memory_space<vmem>>, vector<4x8x8xf32>
    tpu.vector_store %arg16[%c0_40, %c0_41, %c0_42], %42 {strides = array<i32>} : memref<4x8x8xf32, #tpu.memory_space<vmem>>, vector<4x8x8xf32>,
    %c0_43 = arith.constant 0 : index
    %c0_44 = arith.constant 0 : index
    %c0_45 = arith.constant 0 : index
    %44 = vector.load %arg14[%c0_43, %c0_44, %c0_45] : memref<4x8x1xf32, #tpu.memory_space<vmem>>, vector<4x8x1xf32>
    tpu.vector_store %arg14[%c0_43, %c0_44, %c0_45], %25 {strides = array<i32>} : memref<4x8x1xf32, #tpu.memory_space<vmem>>, vector<4x8x1xf32>,
    %c0_i32_46 = arith.constant 0 : i32
    %45 = arith.cmpi eq, %arg2, %c0_i32_46 : i32
    %46 = arith.extui %45 : i1 to i32
    %c0_i32_47 = arith.constant 0 : i32
    %47 = arith.cmpi ne, %46, %c0_i32_47 : i32
    scf.if %47 {
      %c0_48 = arith.constant 0 : index
      %c0_49 = arith.constant 0 : index
      %c0_50 = arith.constant 0 : index
      %48 = vector.load %arg15[%c0_48, %c0_49, %c0_50] : memref<4x8x1xf32, #tpu.memory_space<vmem>>, vector<4x8x1xf32>
      %49 = tpu.reciprocal %48 {approx = true} : vector<4x8x1xf32> -> vector<4x8x1xf32>
      %c0_51 = arith.constant 0 : index
      %c0_52 = arith.constant 0 : index
      %c0_53 = arith.constant 0 : index
      %50 = vector.load %arg16[%c0_51, %c0_52, %c0_53] : memref<4x8x8xf32, #tpu.memory_space<vmem>>, vector<4x8x8xf32>
      %51 = vector.broadcast %49 : vector<4x8x1xf32> to vector<4x8x8xf32>
      %52 = arith.mulf %50, %51 : vector<4x8x8xf32>
      %53 = arith.truncf %52 : vector<4x8x8xf32> to vector<4x8x8xbf16>
      %c0_54 = arith.constant 0 : index
      %c0_55 = arith.constant 0 : index
      %c0_56 = arith.constant 0 : index
      %54 = vector.load %arg10[%c0_54, %c0_55, %c0_56] : memref<4x8x32xbf16, #tpu.memory_space<vmem>>, vector<4x8x32xbf16>
      %cst_57 = arith.constant dense<0.000000e+00> : vector<4x8x32xf32>
      %55 = tpu.matmul %53, %54, %cst_57 {dimension_numbers = #tpu.dot_dimension_numbers<[2], [1], [1], [2], [0, 0, 0, 1, 1, 2], [0], [0]>} : vector<4x8x8xbf16>, vector<4x8x32xbf16>, vector<4x8x32xf32> -> vector<4x8x32xf32>
      %cst_58 = arith.constant dense<0.000000e+00> : vector<8x32xf32>
      %56 = vector.multi_reduction <add>, %55, %cst_58 [0] : vector<4x8x32xf32> to vector<8x32xf32>
      %c0_59 = arith.constant 0 : index
      %c0_60 = arith.constant 0 : index
      %57 = vector.load %arg11[%c0_59, %c0_60] : memref<1x32xf32, #tpu.memory_space<vmem>>, vector<1x32xf32>
      %58 = vector.broadcast %57 : vector<1x32xf32> to vector<8x32xf32>
      %59 = arith.addf %56, %58 : vector<8x32xf32>
      %60 = arith.truncf %59 : vector<8x32xf32> to vector<8x32xbf16>
      %c0_61 = arith.constant 0 : index
      %c0_62 = arith.constant 0 : index
      %c0_63 = arith.constant 0 : index
      %61 = vector.load %arg12[%c0_61, %c0_62, %c0_63] : memref<1x8x32xbf16, #tpu.memory_space<vmem>>, vector<1x8x32xbf16>
      %62 = vector.shape_cast %61 : vector<1x8x32xbf16> to vector<8x32xbf16>
      %63 = vector.shape_cast %60 : vector<8x32xbf16> to vector<1x8x32xbf16>
      tpu.vector_store %arg12[%c0_61, %c0_62, %c0_63], %63 {strides = array<i32>} : memref<1x8x32xbf16, #tpu.memory_space<vmem>>, vector<1x8x32xbf16>,
    } else {
    }
    return
  }
  func.func @transform_0(%arg0: i32, %arg1: i32, %arg2: i32) -> (i32, i32, i32, i32) {
    %c0_i32 = arith.constant 0 : i32
    %c0_i32_0 = arith.constant 0 : i32
    %c0_i32_1 = arith.constant 0 : i32
    return %arg0, %c0_i32, %arg1, %c0_i32_0 : i32, i32, i32, i32
  }
  func.func @transform_1(%arg0: i32, %arg1: i32, %arg2: i32) -> (i32, i32, i32, i32) {
    %c0_i32 = arith.constant 0 : i32
    %c0_i32_0 = arith.constant 0 : i32
    %c0_i32_1 = arith.constant 0 : i32
    return %arg0, %c0_i32, %arg2, %c0_i32_0 : i32, i32, i32, i32
  }
  func.func @transform_2(%arg0: i32, %arg1: i32, %arg2: i32) -> (i32, i32, i32, i32) {
    %c0_i32 = arith.constant 0 : i32
    %c0_i32_0 = arith.constant 0 : i32
    %c0_i32_1 = arith.constant 0 : i32
    return %arg0, %c0_i32, %arg2, %c0_i32_0 : i32, i32, i32, i32
  }
  func.func @transform_3(%arg0: i32, %arg1: i32, %arg2: i32) -> (i32, i32, i32, i32) {
    %c0_i32 = arith.constant 0 : i32
    %c0_i32_0 = arith.constant 0 : i32
    return %arg0, %c0_i32, %arg1, %arg2 : i32, i32, i32, i32
  }
  func.func @transform_4(%arg0: i32, %arg1: i32, %arg2: i32) -> (i32, i32, i32) {
    %c0_i32 = arith.constant 0 : i32
    %c0_i32_0 = arith.constant 0 : i32
    %c0_i32_1 = arith.constant 0 : i32
    %c0_i32_2 = arith.constant 0 : i32
    return %c0_i32, %c0_i32_0, %c0_i32_1 : i32, i32, i32
  }
  func.func @transform_5(%arg0: i32, %arg1: i32, %arg2: i32) -> (i32, i32, i32) {
    %c0_i32 = arith.constant 0 : i32
    %c0_i32_0 = arith.constant 0 : i32
    %c0_i32_1 = arith.constant 0 : i32
    %c0_i32_2 = arith.constant 0 : i32
    return %c0_i32, %c0_i32_0, %c0_i32_1 : i32, i32, i32
  }
  func.func @transform_6(%arg0: i32, %arg1: i32, %arg2: i32) -> (i32, i32, i32) {
    %c0_i32 = arith.constant 0 : i32
    %c0_i32_0 = arith.constant 0 : i32
    %c0_i32_1 = arith.constant 0 : i32
    %c0_i32_2 = arith.constant 0 : i32
    return %c0_i32, %c0_i32_0, %c0_i32_1 : i32, i32, i32
  }
  func.func @transform_7(%arg0: i32, %arg1: i32, %arg2: i32) -> (i32, i32, i32) {
    %c0_i32 = arith.constant 0 : i32
    %c0_i32_0 = arith.constant 0 : i32
    %c0_i32_1 = arith.constant 0 : i32
    %c0_i32_2 = arith.constant 0 : i32
    return %c0_i32, %c0_i32_0, %c0_i32_1 : i32, i32, i32
  }
  func.func @transform_8(%arg0: i32, %arg1: i32, %arg2: i32) -> (i32, i32) {
    %c0_i32 = arith.constant 0 : i32
    %c0_i32_0 = arith.constant 0 : i32
    %c0_i32_1 = arith.constant 0 : i32
    return %c0_i32, %c0_i32_0 : i32, i32
  }
  func.func @transform_9(%arg0: i32, %arg1: i32, %arg2: i32) -> (i32, i32, i32) {
    %c0_i32 = arith.constant 0 : i32
    %c0_i32_0 = arith.constant 0 : i32
    return %arg0, %arg1, %c0_i32 : i32, i32, i32
  }
}

</mosaic_0001>

<llo_original>
// kernel: tpu_custom_call.1
$region0: #{tpu_custom_call.1}
  #allocation0 [shape = 'u32[]', space=smem, size = 0x4, offset = 0x4, fixed_abs, tag = 'smem constant byte address 0x4 - core index']
  #allocation1 [shape = 'u32[144,128]{1,0:T(1,128)}', space=vmem, size = 0x12000, scoped, tag = 'internal scratch']
  #allocation2 [shape = 'bf16[4,8,8]{2,1,0:T(8,128)(2,1)}', space=vmem, size = 0x2000, scoped, tag = 'scratch operand']
  #allocation3 [shape = 'f32[4,8,1]{2,1,0:T(8,128)}', space=vmem, size = 0x4000, scoped, tag = 'scratch operand']
  #allocation4 [shape = 'f32[4,8,1]{2,1,0:T(8,128)}', space=vmem, size = 0x4000, scoped, tag = 'scratch operand']
  #allocation5 [shape = 'f32[4,8,8]{2,1,0:T(8,128)}', space=vmem, size = 0x4000, scoped, tag = 'scratch operand']
  %s0 = inlined_call_operand.hbm [shape: bf16[2,4,8,8], index: 0, kind: input, shape index: {}]
  %s1 = inlined_call_operand.hbm [shape: bf16[2,4,8,8], index: 1, kind: input, shape index: {}]
  %s2 = inlined_call_operand.hbm [shape: bf16[2,4,8,8], index: 2, kind: input, shape index: {}]
  %s3 = inlined_call_operand.hbm [shape: s8[2,4,8,8], index: 3, kind: input, shape index: {}]
  %s4 = inlined_call_operand.hbm [shape: bf16[4,8,8], index: 4, kind: input, shape index: {}]
  %s5 = inlined_call_operand.vmem [shape: bf16[4,8,8], index: 5, kind: input, shape index: {}]
  %s6 = inlined_call_operand.hbm [shape: bf16[4,8,8], index: 6, kind: input, shape index: {}]
  %s7 = inlined_call_operand.hbm [shape: bf16[4,8,32], index: 7, kind: input, shape index: {}]
  %s8 = inlined_call_operand.vmem [shape: f32[1,32], index: 8, kind: input, shape index: {}]
  %s9 = inlined_call_operand.hbm [shape: bf16[2,8,32], index: 9, kind: output, shape index: {}]
  %s10 = sld [smem:[#allocation0]]
  $region105: #{tpu_custom_call.1} parent=0
    _
  %s12 = ssub.s32 1, %s10
  %s13 = scalar_select 0, %s12, %s10
  $region1: #{tpu_custom_call.1} parent=0
    #allocation6 [shape = 'u8[16384]{0}', space=vmem, size = 0x4000, scoped, tag = 'input window, operand 0']
    #allocation7 [shape = 's32[2]{0}', space=sflag, size = 0x8, scoped, tag = 'scoped memory for tpu_custom_call.1']
    #allocation8 [shape = 's32[2]{0}', space=sflag, size = 0x8, scoped, tag = 'scoped memory for tpu_custom_call.1']
    #allocation9 [shape = 'u8[16384]{0}', space=vmem, size = 0x4000, scoped, tag = 'input window, operand 1']
    #allocation10 [shape = 's32[2]{0}', space=sflag, size = 0x8, scoped, tag = 'scoped memory for tpu_custom_call.1']
    #allocation11 [shape = 'u8[16384]{0}', space=vmem, size = 0x4000, scoped, tag = 'input window, operand 2']
    #allocation12 [shape = 'u8[8192]{0}', space=vmem, size = 0x2000, scoped, tag = 'input window, operand 3']
    #allocation13 [shape = 's32[2]{0}', space=sflag, size = 0x8, scoped, tag = 'scoped memory for tpu_custom_call.1']
    #allocation14 [shape = 'u8[8192]{0}', space=vmem, size = 0x2000, scoped, tag = 'input window, operand 4, single buffered']
    #allocation15 [shape = 'u8[8192]{0}', space=vmem, size = 0x2000, scoped, tag = 'input window, operand 6, single buffered']
    #allocation16 [shape = 's32[1]{0}', space=sflag, size = 0x4, scoped, tag = 'scoped memory for tpu_custom_call.1']
    #allocation17 [shape = 'u8[8192]{0}', space=vmem, size = 0x2000, scoped, tag = 'input window, operand 7, single buffered']
    #allocation18 [shape = 'u8[4096]{0}', space=vmem, size = 0x1000, scoped, tag = 'output window, operand 0']
    %14 = vsyncpa [#allocation7], 0
    %s15 = scalar_lea.sflag [#allocation7], 1
    %16 = vsyncpa %s15, 0
    %17 = vsyncpa [#allocation10], 0
    %s18 = scalar_lea.sflag [#allocation10], 1
    %19 = vsyncpa %s18, 0
    %20 = vsyncpa [#allocation13], 0
    %s21 = scalar_lea.sflag [#allocation13], 1
    %22 = vsyncpa %s21, 0
    %23 = vsyncpa [#allocation16], 0
    %24 = vsyncpa [#allocation8], 0
    %s25 = scalar_lea.sflag [#allocation8], 1
    %26 = vsyncpa %s25, 0
    loop: start=0, step=1, limit=4
    $region2: #{tpu_custom_call.1} parent=1 // loop_pre_header
      _
    $region3: #{tpu_custom_call.1} parent=1 // loop_header
      %s28 = sphi 0, %s32
      %p29 = scmp.ge.s32.totalorder %s28, 4
      %s35 = sphi 0, %s54
      %s36 = sphi 0, %s50
      %s37 = sphi 0, %s46
      %s38 = sphi 0, %s35
      %s39 = sphi 0, %s36
      %s40 = sphi 0, %s37
      %s41 = sphi 0, %s38
      %s42 = sphi 0, %s39
      %s43 = sphi 0, %s40
      %s59 = sphi 0, %s61
      %s62 = sphi 0, %s59
      %s63 = sphi 0, %s62
      %s79 = sphi 0, %s63
      %s87 = sphi 0, %s89
      %s90 = sphi 0, %s87
      %s91 = sphi 0, %s90
      %s107 = sphi 0, %s91
      %s115 = sphi 0, %s117
      %s118 = sphi 0, %s115
      %s119 = sphi 0, %s118
      %s135 = sphi 0, %s119
      %s145 = sphi 0, %s147
      %s148 = sphi 0, %s145
      %s149 = sphi 0, %s148
      %s165 = sphi 0, %s149
      %s169 = sphi 0, %s169
      %s171 = sphi 0, %s169
      %s172 = sphi 0, %s171
      %s186 = sphi 0, %s172
      %s190 = sphi 0, %s190
      %s192 = sphi 0, %s190
      %s193 = sphi 0, %s192
      %s207 = sphi 0, %s193
      %s211 = sphi 0, %s211
      %s213 = sphi 0, %s211
      %s214 = sphi 0, %s213
      %s228 = sphi 0, %s214
      %s232 = sphi 0, %s232
      %s234 = sphi 0, %s232
      %s235 = sphi 0, %s234
      %s249 = sphi 0, %s235
      %s253 = sphi 0, %s253
      %s255 = sphi 0, %s253
      %s256 = sphi 0, %s255
      %s270 = sphi 0, %s256
      %s278 = sphi 0, %s280
      %s281 = sphi 0, %s278
      %s282 = sphi 0, %s281
      %s298 = sphi 0, %s282
    $region4: #{tpu_custom_call.1} parent=1 // loop_header_branch
      %31 = sbr.rel (%p29) target = $region8
    $region5: #{tpu_custom_call.1} parent=1 // loop_body
      %s33 = ssub.s32 %s28, 1
      %s34 = ssub.s32 %s28, 2
      %s44 = sadd.s32 1, %s37
      %p45 = scmp.ge.s32.totalorder %s44, 1
      %s46 = scalar_select %p45, 0, %s44
      %s47 = sadd.s32 1, %s36
      %s48 = scalar_select %p45, %s47, %s36
      %p49 = scmp.ge.s32.totalorder %s48, 1
      %s50 = scalar_select %p49, 0, %s48
      %s51 = sadd.s32 1, %s35
      %s52 = scalar_select %p49, %s51, %s35
      %p53 = scmp.ge.s32.totalorder %s52, 2
      %s54 = scalar_select %p53, 0, %s52
      %s55 = ssub.s32 %s35, %s54
      %s56 = ssub.s32 %s36, %s50
      %s57 = sor.u32 %s55, %s56
      %p58 = scmp.eq.s32.totalorder %s57, 0
      %s60 = sadd.s32 %s59, 1
      %s61 = scalar_select %p58, %s59, %s60
      %p64 = pneg %p58
      %p65 = scmp.eq.s32.totalorder %s28, 1
      %p66 = por %p64, %p65
      %p67 = scmp.ne.s32.totalorder %s59, %s62
      %p68 = scmp.eq.s32.totalorder %s28, 0
      %p69 = por %p67, %p68
      %p70 = scmp.ne.s32.totalorder %s59, %s62
      %p71 = scmp.eq.s32.totalorder %s33, 1
      %p72 = por %p70, %p71
      %p73 = scmp.ne.s32.totalorder %s62, %s63
      %p74 = scmp.eq.s32.totalorder %s33, 0
      %p75 = por %p73, %p74
      %p76 = scmp.ne.s32.totalorder %s62, %s63
      %p77 = scmp.eq.s32.totalorder %s34, 1
      %p78 = por %p76, %p77
      %p80 = scmp.ne.s32.totalorder %s63, %s79
      %p81 = scmp.eq.s32.totalorder %s34, 0
      %p82 = por %p80, %p81
      %s83 = ssub.s32 %s35, %s54
      %s84 = ssub.s32 %s37, %s46
      %s85 = sor.u32 %s83, %s84
      %p86 = scmp.eq.s32.totalorder %s85, 0
      %s88 = sadd.s32 %s87, 1
      %s89 = scalar_select %p86, %s87, %s88
      %p92 = pneg %p86
      %p93 = scmp.eq.s32.totalorder %s28, 1
      %p94 = por %p92, %p93
      %p95 = scmp.ne.s32.totalorder %s87, %s90
      %p96 = scmp.eq.s32.totalorder %s28, 0
      %p97 = por %p95, %p96
      %p98 = scmp.ne.s32.totalorder %s87, %s90
      %p99 = scmp.eq.s32.totalorder %s33, 1
      %p100 = por %p98, %p99
      %p101 = scmp.ne.s32.totalorder %s90, %s91
      %p102 = scmp.eq.s32.totalorder %s33, 0
      %p103 = por %p101, %p102
      %p104 = scmp.ne.s32.totalorder %s90, %s91
      %p105 = scmp.eq.s32.totalorder %s34, 1
      %p106 = por %p104, %p105
      %p108 = scmp.ne.s32.totalorder %s91, %s107
      %p109 = scmp.eq.s32.totalorder %s34, 0
      %p110 = por %p108, %p109
      %s111 = ssub.s32 %s35, %s54
      %s112 = ssub.s32 %s37, %s46
      %s113 = sor.u32 %s111, %s112
      %p114 = scmp.eq.s32.totalorder %s113, 0
      %s116 = sadd.s32 %s115, 1
      %s117 = scalar_select %p114, %s115, %s116
      %p120 = pneg %p114
      %p121 = scmp.eq.s32.totalorder %s28, 1
      %p122 = por %p120, %p121
      %p123 = scmp.ne.s32.totalorder %s115, %s118
      %p124 = scmp.eq.s32.totalorder %s28, 0
      %p125 = por %p123, %p124
      %p126 = scmp.ne.s32.totalorder %s115, %s118
      %p127 = scmp.eq.s32.totalorder %s33, 1
      %p128 = por %p126, %p127
      %p129 = scmp.ne.s32.totalorder %s118, %s119
      %p130 = scmp.eq.s32.totalorder %s33, 0
      %p131 = por %p129, %p130
      %p132 = scmp.ne.s32.totalorder %s118, %s119
      %p133 = scmp.eq.s32.totalorder %s34, 1
      %p134 = por %p132, %p133
      %p136 = scmp.ne.s32.totalorder %s119, %s135
      %p137 = scmp.eq.s32.totalorder %s34, 0
      %p138 = por %p136, %p137
      %s139 = ssub.s32 %s35, %s54
      %s140 = ssub.s32 %s36, %s50
      %s141 = sor.u32 %s139, %s140
      %s142 = ssub.s32 %s37, %s46
      %s143 = sor.u32 %s141, %s142
      %p144 = scmp.eq.s32.totalorder %s143, 0
      %s146 = sadd.s32 %s145, 1
      %s147 = scalar_select %p144, %s145, %s146
      %p150 = pneg %p144
      %p151 = scmp.eq.s32.totalorder %s28, 1
      %p152 = por %p150, %p151
      %p153 = scmp.ne.s32.totalorder %s145, %s148
      %p154 = scmp.eq.s32.totalorder %s28, 0
      %p155 = por %p153, %p154
      %p156 = scmp.ne.s32.totalorder %s145, %s148
      %p157 = scmp.eq.s32.totalorder %s33, 1
      %p158 = por %p156, %p157
      %p159 = scmp.ne.s32.totalorder %s148, %s149
      %p160 = scmp.eq.s32.totalorder %s33, 0
      %p161 = por %p159, %p160
      %p162 = scmp.ne.s32.totalorder %s148, %s149
      %p163 = scmp.eq.s32.totalorder %s34, 1
      %p164 = por %p162, %p163
      %p166 = scmp.ne.s32.totalorder %s149, %s165
      %p167 = scmp.eq.s32.totalorder %s34, 0
      %p168 = por %p166, %p167
      %s170 = sadd.s32 %s169, 1
      %p173 = scmp.eq.s32.totalorder %s28, 1
      %p174 = scmp.ne.s32.totalorder %s169, %s171
      %p175 = scmp.eq.s32.totalorder %s28, 0
      %p176 = por %p174, %p175
      %p177 = scmp.ne.s32.totalorder %s169, %s171
      %p178 = scmp.eq.s32.totalorder %s33, 1
      %p179 = por %p177, %p178
      %p180 = scmp.ne.s32.totalorder %s171, %s172
      %p181 = scmp.eq.s32.totalorder %s33, 0
      %p182 = por %p180, %p181
      %p183 = scmp.ne.s32.totalorder %s171, %s172
      %p184 = scmp.eq.s32.totalorder %s34, 1
      %p185 = por %p183, %p184
      %p187 = scmp.ne.s32.totalorder %s172, %s186
      %p188 = scmp.eq.s32.totalorder %s34, 0
      %p189 = por %p187, %p188
      %s191 = sadd.s32 %s190, 1
      %p194 = scmp.eq.s32.totalorder %s28, 1
      %p195 = scmp.ne.s32.totalorder %s190, %s192
      %p196 = scmp.eq.s32.totalorder %s28, 0
      %p197 = por %p195, %p196
      %p198 = scmp.ne.s32.totalorder %s190, %s192
      %p199 = scmp.eq.s32.totalorder %s33, 1
      %p200 = por %p198, %p199
      %p201 = scmp.ne.s32.totalorder %s192, %s193
      %p202 = scmp.eq.s32.totalorder %s33, 0
      %p203 = por %p201, %p202
      %p204 = scmp.ne.s32.totalorder %s192, %s193
      %p205 = scmp.eq.s32.totalorder %s34, 1
      %p206 = por %p204, %p205
      %p208 = scmp.ne.s32.totalorder %s193, %s207
      %p209 = scmp.eq.s32.totalorder %s34, 0
      %p210 = por %p208, %p209
      %s212 = sadd.s32 %s211, 1
      %p215 = scmp.eq.s32.totalorder %s28, 1
      %p216 = scmp.ne.s32.totalorder %s211, %s213
      %p217 = scmp.eq.s32.totalorder %s28, 0
      %p218 = por %p216, %p217
      %p219 = scmp.ne.s32.totalorder %s211, %s213
      %p220 = scmp.eq.s32.totalorder %s33, 1
      %p221 = por %p219, %p220
      %p222 = scmp.ne.s32.totalorder %s213, %s214
      %p223 = scmp.eq.s32.totalorder %s33, 0
      %p224 = por %p222, %p223
      %p225 = scmp.ne.s32.totalorder %s213, %s214
      %p226 = scmp.eq.s32.totalorder %s34, 1
      %p227 = por %p225, %p226
      %p229 = scmp.ne.s32.totalorder %s214, %s228
      %p230 = scmp.eq.s32.totalorder %s34, 0
      %p231 = por %p229, %p230
      %s233 = sadd.s32 %s232, 1
      %p236 = scmp.eq.s32.totalorder %s28, 1
      %p237 = scmp.ne.s32.totalorder %s232, %s234
      %p238 = scmp.eq.s32.totalorder %s28, 0
      %p239 = por %p237, %p238
      %p240 = scmp.ne.s32.totalorder %s232, %s234
      %p241 = scmp.eq.s32.totalorder %s33, 1
      %p242 = por %p240, %p241
      %p243 = scmp.ne.s32.totalorder %s234, %s235
      %p244 = scmp.eq.s32.totalorder %s33, 0
      %p245 = por %p243, %p244
      %p246 = scmp.ne.s32.totalorder %s234, %s235
      %p247 = scmp.eq.s32.totalorder %s34, 1
      %p248 = por %p246, %p247
      %p250 = scmp.ne.s32.totalorder %s235, %s249
      %p251 = scmp.eq.s32.totalorder %s34, 0
      %p252 = por %p250, %p251
      %s254 = sadd.s32 %s253, 1
      %p257 = scmp.eq.s32.totalorder %s28, 1
      %p258 = scmp.ne.s32.totalorder %s253, %s255
      %p259 = scmp.eq.s32.totalorder %s28, 0
      %p260 = por %p258, %p259
      %p261 = scmp.ne.s32.totalorder %s253, %s255
      %p262 = scmp.eq.s32.totalorder %s33, 1
      %p263 = por %p261, %p262
      %p264 = scmp.ne.s32.totalorder %s255, %s256
      %p265 = scmp.eq.s32.totalorder %s33, 0
      %p266 = por %p264, %p265
      %p267 = scmp.ne.s32.totalorder %s255, %s256
      %p268 = scmp.eq.s32.totalorder %s34, 1
      %p269 = por %p267, %p268
      %p271 = scmp.ne.s32.totalorder %s256, %s270
      %p272 = scmp.eq.s32.totalorder %s34, 0
      %p273 = por %p271, %p272
      %s274 = ssub.s32 %s35, %s54
      %s275 = ssub.s32 %s36, %s50
      %s276 = sor.u32 %s274, %s275
      %p277 = scmp.eq.s32.totalorder %s276, 0
      %s279 = sadd.s32 %s278, 1
      %s280 = scalar_select %p277, %s278, %s279
      %p283 = pneg %p277
      %p284 = scmp.eq.s32.totalorder %s28, 1
      %p285 = por %p283, %p284
      %p286 = scmp.ne.s32.totalorder %s278, %s281
      %p287 = scmp.eq.s32.totalorder %s28, 0
      %p288 = por %p286, %p287
      %p289 = scmp.ne.s32.totalorder %s278, %s281
      %p290 = scmp.eq.s32.totalorder %s33, 1
      %p291 = por %p289, %p290
      %p292 = scmp.ne.s32.totalorder %s281, %s282
      %p293 = scmp.eq.s32.totalorder %s33, 0
      %p294 = por %p292, %p293
      %p295 = scmp.ne.s32.totalorder %s281, %s282
      %p296 = scmp.eq.s32.totalorder %s34, 1
      %p297 = por %p295, %p296
      %p299 = scmp.ne.s32.totalorder %s282, %s298
      %p300 = scmp.eq.s32.totalorder %s34, 0
      %p301 = por %p299, %p300
      %p302 = scmp.le.s32.totalorder 1, %s28
      %p303 = scmp.lt.s32.totalorder %s28, 3
      %p304 = pnand %p302, %p303
      %p305 = pneg %p304
      // Predicated region
      $region9: #{tpu_custom_call.1} parent=5 // pred_check
        _
      $region10: #{tpu_custom_call.1} parent=5 // pred_check_branch
        %307 = sbr.rel (%p304) target = $region12
      $region11: #{tpu_custom_call.1} parent=5 // pred_region
        %s308 = ssub.s32 %s28, 1
        // Predicated region
        $region13: #{tpu_custom_call.1} parent=11 // pred_check
          %p309 = pneg %p182
        $region14: #{tpu_custom_call.1} parent=11 // pred_check_branch
          %311 = sbr.rel (%p309) target = $region16
        $region15: #{tpu_custom_call.1} parent=11 // pred_region
          %s313 = ssub.s32 256, 256
          %314 = vsyncadd [#allocation13], %s313
          %s315 = sshll.u32 [#allocation14], 4
          %s316 = int_to_ptr.vmem [resolvable:$true] %s315
          %321 = dma.hbm_to_vmem [thread:$0]  %s4, 256, %s316, [#allocation13], 64, 64, 4
        $region16: #{tpu_custom_call.1} parent=11 // pred_fallthru
          _
        // Predicated region
        $region17: #{tpu_custom_call.1} parent=11 // pred_check
          %p322 = pneg %p203
        $region18: #{tpu_custom_call.1} parent=11 // pred_check_branch
          %324 = sbr.rel (%p322) target = $region20
        $region19: #{tpu_custom_call.1} parent=11 // pred_region
          _
        $region20: #{tpu_custom_call.1} parent=11 // pred_fallthru
          _
        // Predicated region
        $region21: #{tpu_custom_call.1} parent=11 // pred_check
          %p325 = pneg %p224
        $region22: #{tpu_custom_call.1} parent=11 // pred_check_branch
          %327 = sbr.rel (%p325) target = $region24
        $region23: #{tpu_custom_call.1} parent=11 // pred_region
          %s329 = ssub.s32 256, 256
          %330 = vsyncadd [#allocation16], %s329
          %s331 = sshll.u32 [#allocation15], 4
          %s332 = int_to_ptr.vmem [resolvable:$true] %s331
          %337 = dma.hbm_to_vmem [thread:$0]  %s6, 256, %s332, [#allocation16], 64, 64, 4
        $region24: #{tpu_custom_call.1} parent=11 // pred_fallthru
          _
        // Predicated region
        $region25: #{tpu_custom_call.1} parent=11 // pred_check
          %p338 = pneg %p245
        $region26: #{tpu_custom_call.1} parent=11 // pred_check_branch
          %340 = sbr.rel (%p338) target = $region28
        $region27: #{tpu_custom_call.1} parent=11 // pred_region
          %s342 = ssub.s32 256, 256
          %343 = vsyncadd [#allocation16], %s342
          %s344 = sshll.u32 [#allocation17], 4
          %s345 = int_to_ptr.vmem [resolvable:$true] %s344
          %350 = dma.hbm_to_vmem [thread:$0]  %s7, 256, %s345, [#allocation16], 64, 64, 4
        $region28: #{tpu_custom_call.1} parent=11 // pred_fallthru
          _
        // Predicated region
        $region29: #{tpu_custom_call.1} parent=11 // pred_check
          %p351 = pneg %p266
        $region30: #{tpu_custom_call.1} parent=11 // pred_check_branch
          %353 = sbr.rel (%p351) target = $region32
        $region31: #{tpu_custom_call.1} parent=11 // pred_region
          _
        $region32: #{tpu_custom_call.1} parent=11 // pred_fallthru
          _
      $region12: #{tpu_custom_call.1} parent=5 // pred_fallthru
        _
      %p354 = scmp.lt.s32.totalorder %s28, 2
      // Predicated region
      $region33: #{tpu_custom_call.1} parent=5 // pred_check
        %p355 = pneg %p354
      $region34: #{tpu_custom_call.1} parent=5 // pred_check_branch
        %357 = sbr.rel (%p355) target = $region36
      $region35: #{tpu_custom_call.1} parent=5 // pred_region
        // Predicated region
        $region37: #{tpu_custom_call.1} parent=35 // pred_check
          %p358 = pneg %p69
        $region38: #{tpu_custom_call.1} parent=35 // pred_check_branch
          %360 = sbr.rel (%p358) target = $region40
        $region39: #{tpu_custom_call.1} parent=35 // pred_region
          %s361 = sand.u32 %s59, 1
          %s362 = scalar_lea.sflag [#allocation7], %s361
          %s363 = sand.u32 %s59, 1
          %s364 = smul.addr %s363, 16
          %s365 = scalar_lea.vmem [#allocation6], %s364
          %s367 = ssub.s32 256, 256
          %368 = vsyncadd %s362, %s367
          %s369 = smul.addr %s35, 4
          %s370 = sadd.s32 %s36, %s369
          %s371 = smul.addr %s370, 64
          %s372 = scalar_lea.hbm %s0, %s371
          %s373 = sshll.u32 %s365, 4
          %s374 = int_to_ptr.vmem [resolvable:$true] %s373
          %379 = dma.hbm_to_vmem [thread:$0]  %s372, 256, %s374, %s362, 64, 64, 4
        $region40: #{tpu_custom_call.1} parent=35 // pred_fallthru
          _
        // Predicated region
        $region41: #{tpu_custom_call.1} parent=35 // pred_check
          %p380 = pneg %p97
        $region42: #{tpu_custom_call.1} parent=35 // pred_check_branch
          %382 = sbr.rel (%p380) target = $region44
        $region43: #{tpu_custom_call.1} parent=35 // pred_region
          %s383 = sand.u32 %s28, 1
          %s384 = scalar_lea.sflag [#allocation10], %s383
          %s385 = sand.u32 %s87, 1
          %s386 = smul.addr %s385, 16
          %s387 = scalar_lea.vmem [#allocation9], %s386
          %s389 = ssub.s32 256, 256
          %390 = vsyncadd %s384, %s389
          %s391 = smul.addr %s35, 4
          %s392 = sadd.s32 %s37, %s391
          %s393 = smul.addr %s392, 64
          %s394 = scalar_lea.hbm %s1, %s393
          %s395 = sshll.u32 %s387, 4
          %s396 = int_to_ptr.vmem [resolvable:$true] %s395
          %401 = dma.hbm_to_vmem [thread:$0]  %s394, 256, %s396, %s384, 64, 64, 4
        $region44: #{tpu_custom_call.1} parent=35 // pred_fallthru
          _
        // Predicated region
        $region45: #{tpu_custom_call.1} parent=35 // pred_check
          %p402 = pneg %p125
        $region46: #{tpu_custom_call.1} parent=35 // pred_check_branch
          %404 = sbr.rel (%p402) target = $region48
        $region47: #{tpu_custom_call.1} parent=35 // pred_region
          %s405 = sand.u32 %s28, 1
          %s406 = scalar_lea.sflag [#allocation10], %s405
          %s407 = sand.u32 %s115, 1
          %s408 = smul.addr %s407, 16
          %s409 = scalar_lea.vmem [#allocation11], %s408
          %s411 = ssub.s32 256, 256
          %412 = vsyncadd %s406, %s411
          %s413 = smul.addr %s35, 4
          %s414 = sadd.s32 %s37, %s413
          %s415 = smul.addr %s414, 64
          %s416 = scalar_lea.hbm %s2, %s415
          %s417 = sshll.u32 %s409, 4
          %s418 = int_to_ptr.vmem [resolvable:$true] %s417
          %423 = dma.hbm_to_vmem [thread:$0]  %s416, 256, %s418, %s406, 64, 64, 4
        $region48: #{tpu_custom_call.1} parent=35 // pred_fallthru
          _
        // Predicated region
        $region49: #{tpu_custom_call.1} parent=35 // pred_check
          %p424 = pneg %p155
        $region50: #{tpu_custom_call.1} parent=35 // pred_check_branch
          %426 = sbr.rel (%p424) target = $region52
        $region51: #{tpu_custom_call.1} parent=35 // pred_region
          %s427 = sand.u32 %s28, 1
          %s428 = scalar_lea.sflag [#allocation13], %s427
          %s429 = sand.u32 %s145, 1
          %s430 = smul.addr %s429, 8
          %s431 = scalar_lea.vmem [#allocation12], %s430
          %s433 = ssub.s32 128, 128
          %434 = vsyncadd %s428, %s433
          %s435 = sadd.s32 %s37, %s36
          %s436 = smul.addr %s35, 4
          %s437 = sadd.s32 %s435, %s436
          %s438 = smul.addr %s437, 32
          %s439 = scalar_lea.hbm %s3, %s438
          %s440 = sshll.u32 %s431, 4
          %s441 = int_to_ptr.vmem [resolvable:$true] %s440
          %446 = dma.hbm_to_vmem [thread:$0]  %s439, 128, %s441, %s428, 32, 32, 2
        $region52: #{tpu_custom_call.1} parent=35 // pred_fallthru
          _
      $region36: #{tpu_custom_call.1} parent=5 // pred_fallthru
        _
      %p447 = scmp.le.s32.totalorder 1, %s28
      %p448 = scmp.lt.s32.totalorder %s28, 3
      %p449 = pnand %p447, %p448
      %p450 = pneg %p449
      // Predicated region
      $region53: #{tpu_custom_call.1} parent=5 // pred_check
        _
      $region54: #{tpu_custom_call.1} parent=5 // pred_check_branch
        %452 = sbr.rel (%p449) target = $region56
      $region55: #{tpu_custom_call.1} parent=5 // pred_region
        %s453 = ssub.s32 %s28, 1
        %s454 = sand.u32 %s62, 1
        %s455 = scalar_lea.sflag [#allocation7], %s454
        %s456 = sand.u32 %s62, 1
        %s457 = smul.addr %s456, 16
        %s458 = scalar_lea.vmem [#allocation6], %s457
        // Predicated region
        $region57: #{tpu_custom_call.1} parent=55 // pred_check
          %p459 = pneg %p75
        $region58: #{tpu_custom_call.1} parent=55 // pred_check_branch
          %461 = sbr.rel (%p459) target = $region60
        $region59: #{tpu_custom_call.1} parent=55 // pred_region
          %462 = dma.done %s455, 256
        $region60: #{tpu_custom_call.1} parent=55 // pred_fallthru
          _
        %s463 = sand.u32 %s33, 1
        %s464 = scalar_lea.sflag [#allocation10], %s463
        %s465 = sand.u32 %s90, 1
        %s466 = smul.addr %s465, 16
        %s467 = scalar_lea.vmem [#allocation9], %s466
        // Predicated region
        $region61: #{tpu_custom_call.1} parent=55 // pred_check
          %p468 = pneg %p103
        $region62: #{tpu_custom_call.1} parent=55 // pred_check_branch
          %470 = sbr.rel (%p468) target = $region64
        $region63: #{tpu_custom_call.1} parent=55 // pred_region
          %471 = dma.done %s464, 256
        $region64: #{tpu_custom_call.1} parent=55 // pred_fallthru
          _
        %s472 = sand.u32 %s33, 1
        %s473 = scalar_lea.sflag [#allocation10], %s472
        %s474 = sand.u32 %s118, 1
        %s475 = smul.addr %s474, 16
        %s476 = scalar_lea.vmem [#allocation11], %s475
        // Predicated region
        $region65: #{tpu_custom_call.1} parent=55 // pred_check
          %p477 = pneg %p131
        $region66: #{tpu_custom_call.1} parent=55 // pred_check_branch
          %479 = sbr.rel (%p477) target = $region68
        $region67: #{tpu_custom_call.1} parent=55 // pred_region
          %480 = dma.done %s473, 256
        $region68: #{tpu_custom_call.1} parent=55 // pred_fallthru
          _
        %s481 = sand.u32 %s33, 1
        %s482 = scalar_lea.sflag [#allocation13], %s481
        %s483 = sand.u32 %s148, 1
        %s484 = smul.addr %s483, 8
        %s485 = scalar_lea.vmem [#allocation12], %s484
        // Predicated region
        $region69: #{tpu_custom_call.1} parent=55 // pred_check
          %p486 = pneg %p161
        $region70: #{tpu_custom_call.1} parent=55 // pred_check_branch
          %488 = sbr.rel (%p486) target = $region72
        $region71: #{tpu_custom_call.1} parent=55 // pred_region
          %489 = dma.done %s482, 128
        $region72: #{tpu_custom_call.1} parent=55 // pred_fallthru
          _
        // Predicated region
        $region73: #{tpu_custom_call.1} parent=55 // pred_check
          %p490 = pneg %p182
        $region74: #{tpu_custom_call.1} parent=55 // pred_check_branch
          %492 = sbr.rel (%p490) target = $region76
        $region75: #{tpu_custom_call.1} parent=55 // pred_region
          %493 = dma.done [#allocation13], 256
        $region76: #{tpu_custom_call.1} parent=55 // pred_fallthru
          _
        // Predicated region
        $region77: #{tpu_custom_call.1} parent=55 // pred_check
          %p494 = pneg %p224
        $region78: #{tpu_custom_call.1} parent=55 // pred_check_branch
          %496 = sbr.rel (%p494) target = $region80
        $region79: #{tpu_custom_call.1} parent=55 // pred_region
          %497 = dma.done [#allocation16], 256
        $region80: #{tpu_custom_call.1} parent=55 // pred_fallthru
          _
        // Predicated region
        $region81: #{tpu_custom_call.1} parent=55 // pred_check
          %p498 = pneg %p245
        $region82: #{tpu_custom_call.1} parent=55 // pred_check_branch
          %500 = sbr.rel (%p498) target = $region84
        $region83: #{tpu_custom_call.1} parent=55 // pred_region
          %501 = dma.done [#allocation16], 256
        $region84: #{tpu_custom_call.1} parent=55 // pred_fallthru
          _
        %s502 = sand.u32 %s62, 1
        %s503 = scalar_lea.sflag [#allocation7], %s502
        %s504 = sand.u32 %s62, 1
        %s505 = smul.addr %s504, 16
        %s506 = scalar_lea.vmem [#allocation6], %s505
        %p507 = pneg %p75
        %p508 = pneg %p72
        %s509 = sand.u32 %s33, 1
        %s510 = scalar_lea.sflag [#allocation10], %s509
        %s511 = sand.u32 %s90, 1
        %s512 = smul.addr %s511, 16
        %s513 = scalar_lea.vmem [#allocation9], %s512
        %p514 = pneg %p103
        %p515 = pneg %p100
        %s516 = sand.u32 %s33, 1
        %s517 = scalar_lea.sflag [#allocation10], %s516
        %s518 = sand.u32 %s118, 1
        %s519 = smul.addr %s518, 16
        %s520 = scalar_lea.vmem [#allocation11], %s519
        %p521 = pneg %p131
        %p522 = pneg %p128
        %s523 = sand.u32 %s33, 1
        %s524 = scalar_lea.sflag [#allocation13], %s523
        %s525 = sand.u32 %s148, 1
        %s526 = smul.addr %s525, 8
        %s527 = scalar_lea.vmem [#allocation12], %s526
        %p528 = pneg %p161
        %p529 = pneg %p158
        %p530 = pneg %p182
        %p531 = pneg %p179
        %p532 = pneg %p203
        %p533 = pneg %p200
        %p534 = pneg %p224
        %p535 = pneg %p221
        %p536 = pneg %p245
        %p537 = pneg %p242
        %p538 = pneg %p266
        %p539 = pneg %p263
        %p540 = pneg %p294
        %p541 = pneg %p291
        %s542 = sand.u32 %s281, 1
        %s543 = scalar_lea.sflag [#allocation8], %s542
        %s544 = sand.u32 %s281, 1
        %s545 = smul.addr %s544, 4
        %s546 = scalar_lea.vmem [#allocation18], %s545
        %p548 = scmp.eq.s32.totalorder %s40, 0
        // Predicated region
        $region85: #{tpu_custom_call.1} parent=55 // pred_check
          %p549 = pneg %p548
        $region86: #{tpu_custom_call.1} parent=55 // pred_check_branch
          %551 = sbr.rel (%p549) target = $region88
        $region87: #{tpu_custom_call.1} parent=55 // pred_region
          %v552 = vld [vmem:[%s458] sm:$0xf]
          %v553 = vld [vmem:[%s458 + $0x4] sm:$0xf]
          %v554 = vld [vmem:[%s458 + $0x8] sm:$0xf]
          %v555 = vld [vmem:[%s458 + $0xc] sm:$0xf]
          %v556 = vld [vmem:[#allocation14] sm:$0xf]
          %v557 = vld [vmem:[#allocation14 + $0x4] sm:$0xf]
          %v558 = vld [vmem:[#allocation14 + $0x8] sm:$0xf]
          %v559 = vld [vmem:[#allocation14 + $0xc] sm:$0xf]
          %vm560 = vcmask 64512
          %v562 = vsel %vm560, %v552, 0
          %vm564 = vcmask 1043456
          %v566 = vsel %vm564, %v556, 0
          %568 = vmatprep.subr.bf16.mxu0 0
          %569 = vmatpush1.bf16.msra.mxu0 %v566
          %570 = vmatprep.subr.bf16.mxu0 0
          %571 = vmatpush1.bf16.msra.mxu0 0
          %572 = vmatprep.subr.bf16.mxu0 0
          %573 = vmatpush1.bf16.msra.mxu0 0
          %574 = vmatprep.subr.bf16.mxu0 0
          %575 = vmatpush1.bf16.msra.mxu0 0
          %576 = vmatprep.subr.bf16.mxu0 0
          %577 = vmatpush1.bf16.msra.mxu0 0
          %578 = vmatprep.subr.bf16.mxu0 0
          %579 = vmatpush1.bf16.msra.mxu0 0
          %580 = vmatprep.subr.bf16.mxu0 0
          %581 = vmatpush1.bf16.msra.mxu0 0
          %582 = vmatprep.subr.bf16.mxu0 0
          %583 = vmatpush1.bf16.msra.mxu0 0
          %584 = vmatprep.subr.bf16.mxu0 0
          %585 = vmatpush1.bf16.msra.mxu0 0
          %586 = vmatprep.subr.bf16.mxu0 0
          %587 = vmatpush1.bf16.msra.mxu0 0
          %588 = vmatprep.subr.bf16.mxu0 0
          %589 = vmatpush1.bf16.msra.mxu0 0
          %590 = vmatprep.subr.bf16.mxu0 0
          %591 = vmatpush1.bf16.msra.mxu0 0
          %592 = vmatprep.subr.bf16.mxu0 0
          %593 = vmatpush1.bf16.msra.mxu0 0
          %594 = vmatprep.subr.bf16.mxu0 0
          %595 = vmatpush1.bf16.msra.mxu0 0
          %596 = vmatprep.subr.bf16.mxu0 0
          %597 = vmatpush1.bf16.msra.mxu0 0
          %598 = vmatprep.subr.bf16.mxu0 0
          %599 = vmatpush1.bf16.msra.mxu0 0
          %600 = vmatprep.mubr.bf16.mxu0 0
          %601 = vmatmul.mubr.bf16.gmra.mrb[0].mxu0 %v562
          %v602 = vpop.f32.mrb[0].mxu0
          %v603 = vadd.f32 0.0, %v602
          %v604 = vpop.f32.mrb[0].mxu0
          %v605 = vpop.f32.mrb[0].mxu0
          %v606 = vpop.f32.mrb[0].mxu0
          %607 = vdwg.mxu0
          %v609 = vsel %vm560, %v553, 0
          %v612 = vsel %vm564, %v557, 0
          %614 = vmatprep.subr.bf16.mxu0 0
          %615 = vmatpush1.bf16.msra.mxu0 %v612
          %616 = vmatprep.subr.bf16.mxu0 0
          %617 = vmatpush1.bf16.msra.mxu0 0
          %618 = vmatprep.subr.bf16.mxu0 0
          %619 = vmatpush1.bf16.msra.mxu0 0
          %620 = vmatprep.subr.bf16.mxu0 0
          %621 = vmatpush1.bf16.msra.mxu0 0
          %622 = vmatprep.subr.bf16.mxu0 0
          %623 = vmatpush1.bf16.msra.mxu0 0
          %624 = vmatprep.subr.bf16.mxu0 0
          %625 = vmatpush1.bf16.msra.mxu0 0
          %626 = vmatprep.subr.bf16.mxu0 0
          %627 = vmatpush1.bf16.msra.mxu0 0
          %628 = vmatprep.subr.bf16.mxu0 0
          %629 = vmatpush1.bf16.msra.mxu0 0
          %630 = vmatprep.subr.bf16.mxu0 0
          %631 = vmatpush1.bf16.msra.mxu0 0
          %632 = vmatprep.subr.bf16.mxu0 0
          %633 = vmatpush1.bf16.msra.mxu0 0
          %634 = vmatprep.subr.bf16.mxu0 0
          %635 = vmatpush1.bf16.msra.mxu0 0
          %636 = vmatprep.subr.bf16.mxu0 0
          %637 = vmatpush1.bf16.msra.mxu0 0
          %638 = vmatprep.subr.bf16.mxu0 0
          %639 = vmatpush1.bf16.msra.mxu0 0
          %640 = vmatprep.subr.bf16.mxu0 0
          %641 = vmatpush1.bf16.msra.mxu0 0
          %642 = vmatprep.subr.bf16.mxu0 0
          %643 = vmatpush1.bf16.msra.mxu0 0
          %644 = vmatprep.subr.bf16.mxu0 0
          %645 = vmatpush1.bf16.msra.mxu0 0
          %646 = vmatprep.mubr.bf16.mxu0 0
          %647 = vmatmul.mubr.bf16.gmra.mrb[0].mxu0 %v609
          %v648 = vpop.f32.mrb[0].mxu0
          %v649 = vadd.f32 0.0, %v648
          %v650 = vpop.f32.mrb[0].mxu0
          %v651 = vpop.f32.mrb[0].mxu0
          %v652 = vpop.f32.mrb[0].mxu0
          %653 = vdwg.mxu0
          %v655 = vsel %vm560, %v554, 0
          %v658 = vsel %vm564, %v558, 0
          %660 = vmatprep.subr.bf16.mxu0 0
          %661 = vmatpush1.bf16.msra.mxu0 %v658
          %662 = vmatprep.subr.bf16.mxu0 0
          %663 = vmatpush1.bf16.msra.mxu0 0
          %664 = vmatprep.subr.bf16.mxu0 0
          %665 = vmatpush1.bf16.msra.mxu0 0
          %666 = vmatprep.subr.bf16.mxu0 0
          %667 = vmatpush1.bf16.msra.mxu0 0
          %668 = vmatprep.subr.bf16.mxu0 0
          %669 = vmatpush1.bf16.msra.mxu0 0
          %670 = vmatprep.subr.bf16.mxu0 0
          %671 = vmatpush1.bf16.msra.mxu0 0
          %672 = vmatprep.subr.bf16.mxu0 0
          %673 = vmatpush1.bf16.msra.mxu0 0
          %674 = vmatprep.subr.bf16.mxu0 0
          %675 = vmatpush1.bf16.msra.mxu0 0
          %676 = vmatprep.subr.bf16.mxu0 0
          %677 = vmatpush1.bf16.msra.mxu0 0
          %678 = vmatprep.subr.bf16.mxu0 0
          %679 = vmatpush1.bf16.msra.mxu0 0
          %680 = vmatprep.subr.bf16.mxu0 0
          %681 = vmatpush1.bf16.msra.mxu0 0
          %682 = vmatprep.subr.bf16.mxu0 0
          %683 = vmatpush1.bf16.msra.mxu0 0
          %684 = vmatprep.subr.bf16.mxu0 0
          %685 = vmatpush1.bf16.msra.mxu0 0
          %686 = vmatprep.subr.bf16.mxu0 0
          %687 = vmatpush1.bf16.msra.mxu0 0
          %688 = vmatprep.subr.bf16.mxu0 0
          %689 = vmatpush1.bf16.msra.mxu0 0
          %690 = vmatprep.subr.bf16.mxu0 0
          %691 = vmatpush1.bf16.msra.mxu0 0
          %692 = vmatprep.mubr.bf16.mxu0 0
          %693 = vmatmul.mubr.bf16.gmra.mrb[0].mxu0 %v655
          %v694 = vpop.f32.mrb[0].mxu0
          %v695 = vadd.f32 0.0, %v694
          %v696 = vpop.f32.mrb[0].mxu0
          %v697 = vpop.f32.mrb[0].mxu0
          %v698 = vpop.f32.mrb[0].mxu0
          %699 = vdwg.mxu0
          %v701 = vsel %vm560, %v555, 0
          %v704 = vsel %vm564, %v559, 0
          %706 = vmatprep.subr.bf16.mxu0 0
          %707 = vmatpush1.bf16.msra.mxu0 %v704
          %708 = vmatprep.subr.bf16.mxu0 0
          %709 = vmatpush1.bf16.msra.mxu0 0
          %710 = vmatprep.subr.bf16.mxu0 0
          %711 = vmatpush1.bf16.msra.mxu0 0
          %712 = vmatprep.subr.bf16.mxu0 0
          %713 = vmatpush1.bf16.msra.mxu0 0
          %714 = vmatprep.subr.bf16.mxu0 0
          %715 = vmatpush1.bf16.msra.mxu0 0
          %716 = vmatprep.subr.bf16.mxu0 0
          %717 = vmatpush1.bf16.msra.mxu0 0
          %718 = vmatprep.subr.bf16.mxu0 0
          %719 = vmatpush1.bf16.msra.mxu0 0
          %720 = vmatprep.subr.bf16.mxu0 0
          %721 = vmatpush1.bf16.msra.mxu0 0
          %722 = vmatprep.subr.bf16.mxu0 0
          %723 = vmatpush1.bf16.msra.mxu0 0
          %724 = vmatprep.subr.bf16.mxu0 0
          %725 = vmatpush1.bf16.msra.mxu0 0
          %726 = vmatprep.subr.bf16.mxu0 0
          %727 = vmatpush1.bf16.msra.mxu0 0
          %728 = vmatprep.subr.bf16.mxu0 0
          %729 = vmatpush1.bf16.msra.mxu0 0
          %730 = vmatprep.subr.bf16.mxu0 0
          %731 = vmatpush1.bf16.msra.mxu0 0
          %732 = vmatprep.subr.bf16.mxu0 0
          %733 = vmatpush1.bf16.msra.mxu0 0
          %734 = vmatprep.subr.bf16.mxu0 0
          %735 = vmatpush1.bf16.msra.mxu0 0
          %736 = vmatprep.subr.bf16.mxu0 0
          %737 = vmatpush1.bf16.msra.mxu0 0
          %738 = vmatprep.mubr.bf16.mxu0 0
          %739 = vmatmul.mubr.bf16.gmra.mrb[0].mxu0 %v701
          %v740 = vpop.f32.mrb[0].mxu0
          %v741 = vadd.f32 0.0, %v740
          %v742 = vpop.f32.mrb[0].mxu0
          %v743 = vpop.f32.mrb[0].mxu0
          %v744 = vpop.f32.mrb[0].mxu0
          %745 = vdwg.mxu0
          %v746 = vpack.c.bf16 %v603, %v603
          %v747 = vpack.c.bf16 %v649, %v649
          %v748 = vpack.c.bf16 %v695, %v695
          %v749 = vpack.c.bf16 %v741, %v741
          %vm750 = vcmask 60416
          %751 = vst.msk [vmem:[#allocation2] sm:$0xf] %vm750, %v746
          %752 = vst.msk [vmem:[#allocation2 + $0x4] sm:$0xf] %vm750, %v747
          %753 = vst.msk [vmem:[#allocation2 + $0x8] sm:$0xf] %vm750, %v748
          %754 = vst.msk [vmem:[#allocation2 + $0xc] sm:$0xf] %vm750, %v749
          %vm755 = vcmask 7168
          %756 = vst.msk [vmem:[#allocation3] sm:$0xff] %vm755, -inf
          %757 = vst.msk [vmem:[#allocation3 + $0x8] sm:$0xff] %vm755, -inf
          %758 = vst.msk [vmem:[#allocation3 + $0x10] sm:$0xff] %vm755, -inf
          %759 = vst.msk [vmem:[#allocation3 + $0x18] sm:$0xff] %vm755, -inf
          %760 = vst.msk [vmem:[#allocation4] sm:$0xff] %vm755, 0.0
          %761 = vst.msk [vmem:[#allocation4 + $0x8] sm:$0xff] %vm755, 0.0
          %762 = vst.msk [vmem:[#allocation4 + $0x10] sm:$0xff] %vm755, 0.0
          %763 = vst.msk [vmem:[#allocation4 + $0x18] sm:$0xff] %vm755, 0.0
          %764 = vst.msk [vmem:[#allocation5] sm:$0xff] %vm560, 0.0
          %765 = vst.msk [vmem:[#allocation5 + $0x8] sm:$0xff] %vm560, 0.0
          %766 = vst.msk [vmem:[#allocation5 + $0x10] sm:$0xff] %vm560, 0.0
          %767 = vst.msk [vmem:[#allocation5 + $0x18] sm:$0xff] %vm560, 0.0
        $region88: #{tpu_custom_call.1} parent=55 // pred_fallthru
          _
        %v768 = vld [vmem:[%s467] sm:$0xf]
        %v769 = vld [vmem:[%s467 + $0x4] sm:$0xf]
        %v770 = vld [vmem:[%s467 + $0x8] sm:$0xf]
        %v771 = vld [vmem:[%s467 + $0xc] sm:$0xf]
        %v772 = vld [vmem:[%s5] sm:$0xf]
        %v773 = vld [vmem:[%s5 + $0x4] sm:$0xf]
        %v774 = vld [vmem:[%s5 + $0x8] sm:$0xf]
        %v775 = vld [vmem:[%s5 + $0xc] sm:$0xf]
        %vm776 = vcmask 64512
        %v778 = vsel %vm776, %v768, 0
        %vm780 = vcmask 1043456
        %v782 = vsel %vm780, %v772, 0
        %784 = vmatprep.subr.bf16.mxu0 0
        %785 = vmatpush1.bf16.msra.mxu0 %v782
        %786 = vmatprep.subr.bf16.mxu0 0
        %787 = vmatpush1.bf16.msra.mxu0 0
        %788 = vmatprep.subr.bf16.mxu0 0
        %789 = vmatpush1.bf16.msra.mxu0 0
        %790 = vmatprep.subr.bf16.mxu0 0
        %791 = vmatpush1.bf16.msra.mxu0 0
        %792 = vmatprep.subr.bf16.mxu0 0
        %793 = vmatpush1.bf16.msra.mxu0 0
        %794 = vmatprep.subr.bf16.mxu0 0
        %795 = vmatpush1.bf16.msra.mxu0 0
        %796 = vmatprep.subr.bf16.mxu0 0
        %797 = vmatpush1.bf16.msra.mxu0 0
        %798 = vmatprep.subr.bf16.mxu0 0
        %799 = vmatpush1.bf16.msra.mxu0 0
        %800 = vmatprep.subr.bf16.mxu0 0
        %801 = vmatpush1.bf16.msra.mxu0 0
        %802 = vmatprep.subr.bf16.mxu0 0
        %803 = vmatpush1.bf16.msra.mxu0 0
        %804 = vmatprep.subr.bf16.mxu0 0
        %805 = vmatpush1.bf16.msra.mxu0 0
        %806 = vmatprep.subr.bf16.mxu0 0
        %807 = vmatpush1.bf16.msra.mxu0 0
        %808 = vmatprep.subr.bf16.mxu0 0
        %809 = vmatpush1.bf16.msra.mxu0 0
        %810 = vmatprep.subr.bf16.mxu0 0
        %811 = vmatpush1.bf16.msra.mxu0 0
        %812 = vmatprep.subr.bf16.mxu0 0
        %813 = vmatpush1.bf16.msra.mxu0 0
        %814 = vmatprep.subr.bf16.mxu0 0
        %815 = vmatpush1.bf16.msra.mxu0 0
        %816 = vmatprep.mubr.bf16.mxu0 0
        %817 = vmatmul.mubr.bf16.gmra.mrb[0].mxu0 %v778
        %v818 = vpop.f32.mrb[0].mxu0
        %v819 = vadd.f32 0.0, %v818
        %v820 = vpop.f32.mrb[0].mxu0
        %v821 = vpop.f32.mrb[0].mxu0
        %v822 = vpop.f32.mrb[0].mxu0
        %823 = vdwg.mxu0
        %v825 = vsel %vm776, %v769, 0
        %v828 = vsel %vm780, %v773, 0
        %830 = vmatprep.subr.bf16.mxu0 0
        %831 = vmatpush1.bf16.msra.mxu0 %v828
        %832 = vmatprep.subr.bf16.mxu0 0
        %833 = vmatpush1.bf16.msra.mxu0 0
        %834 = vmatprep.subr.bf16.mxu0 0
        %835 = vmatpush1.bf16.msra.mxu0 0
        %836 = vmatprep.subr.bf16.mxu0 0
        %837 = vmatpush1.bf16.msra.mxu0 0
        %838 = vmatprep.subr.bf16.mxu0 0
        %839 = vmatpush1.bf16.msra.mxu0 0
        %840 = vmatprep.subr.bf16.mxu0 0
        %841 = vmatpush1.bf16.msra.mxu0 0
        %842 = vmatprep.subr.bf16.mxu0 0
        %843 = vmatpush1.bf16.msra.mxu0 0
        %844 = vmatprep.subr.bf16.mxu0 0
        %845 = vmatpush1.bf16.msra.mxu0 0
        %846 = vmatprep.subr.bf16.mxu0 0
        %847 = vmatpush1.bf16.msra.mxu0 0
        %848 = vmatprep.subr.bf16.mxu0 0
        %849 = vmatpush1.bf16.msra.mxu0 0
        %850 = vmatprep.subr.bf16.mxu0 0
        %851 = vmatpush1.bf16.msra.mxu0 0
        %852 = vmatprep.subr.bf16.mxu0 0
        %853 = vmatpush1.bf16.msra.mxu0 0
        %854 = vmatprep.subr.bf16.mxu0 0
        %855 = vmatpush1.bf16.msra.mxu0 0
        %856 = vmatprep.subr.bf16.mxu0 0
        %857 = vmatpush1.bf16.msra.mxu0 0
        %858 = vmatprep.subr.bf16.mxu0 0
        %859 = vmatpush1.bf16.msra.mxu0 0
        %860 = vmatprep.subr.bf16.mxu0 0
        %861 = vmatpush1.bf16.msra.mxu0 0
        %862 = vmatprep.mubr.bf16.mxu0 0
        %863 = vmatmul.mubr.bf16.gmra.mrb[0].mxu0 %v825
        %v864 = vpop.f32.mrb[0].mxu0
        %v865 = vadd.f32 0.0, %v864
        %v866 = vpop.f32.mrb[0].mxu0
        %v867 = vpop.f32.mrb[0].mxu0
        %v868 = vpop.f32.mrb[0].mxu0
        %869 = vdwg.mxu0
        %v871 = vsel %vm776, %v770, 0
        %v874 = vsel %vm780, %v774, 0
        %876 = vmatprep.subr.bf16.mxu0 0
        %877 = vmatpush1.bf16.msra.mxu0 %v874
        %878 = vmatprep.subr.bf16.mxu0 0
        %879 = vmatpush1.bf16.msra.mxu0 0
        %880 = vmatprep.subr.bf16.mxu0 0
        %881 = vmatpush1.bf16.msra.mxu0 0
        %882 = vmatprep.subr.bf16.mxu0 0
        %883 = vmatpush1.bf16.msra.mxu0 0
        %884 = vmatprep.subr.bf16.mxu0 0
        %885 = vmatpush1.bf16.msra.mxu0 0
        %886 = vmatprep.subr.bf16.mxu0 0
        %887 = vmatpush1.bf16.msra.mxu0 0
        %888 = vmatprep.subr.bf16.mxu0 0
        %889 = vmatpush1.bf16.msra.mxu0 0
        %890 = vmatprep.subr.bf16.mxu0 0
        %891 = vmatpush1.bf16.msra.mxu0 0
        %892 = vmatprep.subr.bf16.mxu0 0
        %893 = vmatpush1.bf16.msra.mxu0 0
        %894 = vmatprep.subr.bf16.mxu0 0
        %895 = vmatpush1.bf16.msra.mxu0 0
        %896 = vmatprep.subr.bf16.mxu0 0
        %897 = vmatpush1.bf16.msra.mxu0 0
        %898 = vmatprep.subr.bf16.mxu0 0
        %899 = vmatpush1.bf16.msra.mxu0 0
        %900 = vmatprep.subr.bf16.mxu0 0
        %901 = vmatpush1.bf16.msra.mxu0 0
        %902 = vmatprep.subr.bf16.mxu0 0
        %903 = vmatpush1.bf16.msra.mxu0 0
        %904 = vmatprep.subr.bf16.mxu0 0
        %905 = vmatpush1.bf16.msra.mxu0 0
        %906 = vmatprep.subr.bf16.mxu0 0
        %907 = vmatpush1.bf16.msra.mxu0 0
        %908 = vmatprep.mubr.bf16.mxu0 0
        %909 = vmatmul.mubr.bf16.gmra.mrb[0].mxu0 %v871
        %v910 = vpop.f32.mrb[0].mxu0
        %v911 = vadd.f32 0.0, %v910
        %v912 = vpop.f32.mrb[0].mxu0
        %v913 = vpop.f32.mrb[0].mxu0
        %v914 = vpop.f32.mrb[0].mxu0
        %915 = vdwg.mxu0
        %v917 = vsel %vm776, %v771, 0
        %v920 = vsel %vm780, %v775, 0
        %922 = vmatprep.subr.bf16.mxu0 0
        %923 = vmatpush1.bf16.msra.mxu0 %v920
        %924 = vmatprep.subr.bf16.mxu0 0
        %925 = vmatpush1.bf16.msra.mxu0 0
        %926 = vmatprep.subr.bf16.mxu0 0
        %927 = vmatpush1.bf16.msra.mxu0 0
        %928 = vmatprep.subr.bf16.mxu0 0
        %929 = vmatpush1.bf16.msra.mxu0 0
        %930 = vmatprep.subr.bf16.mxu0 0
        %931 = vmatpush1.bf16.msra.mxu0 0
        %932 = vmatprep.subr.bf16.mxu0 0
        %933 = vmatpush1.bf16.msra.mxu0 0
        %934 = vmatprep.subr.bf16.mxu0 0
        %935 = vmatpush1.bf16.msra.mxu0 0
        %936 = vmatprep.subr.bf16.mxu0 0
        %937 = vmatpush1.bf16.msra.mxu0 0
        %938 = vmatprep.subr.bf16.mxu0 0
        %939 = vmatpush1.bf16.msra.mxu0 0
        %940 = vmatprep.subr.bf16.mxu0 0
        %941 = vmatpush1.bf16.msra.mxu0 0
        %942 = vmatprep.subr.bf16.mxu0 0
        %943 = vmatpush1.bf16.msra.mxu0 0
        %944 = vmatprep.subr.bf16.mxu0 0
        %945 = vmatpush1.bf16.msra.mxu0 0
        %946 = vmatprep.subr.bf16.mxu0 0
        %947 = vmatpush1.bf16.msra.mxu0 0
        %948 = vmatprep.subr.bf16.mxu0 0
        %949 = vmatpush1.bf16.msra.mxu0 0
        %950 = vmatprep.subr.bf16.mxu0 0
        %951 = vmatpush1.bf16.msra.mxu0 0
        %952 = vmatprep.subr.bf16.mxu0 0
        %953 = vmatpush1.bf16.msra.mxu0 0
        %954 = vmatprep.mubr.bf16.mxu0 0
        %955 = vmatmul.mubr.bf16.gmra.mrb[0].mxu0 %v917
        %v956 = vpop.f32.mrb[0].mxu0
        %v957 = vadd.f32 0.0, %v956
        %v958 = vpop.f32.mrb[0].mxu0
        %v959 = vpop.f32.mrb[0].mxu0
        %v960 = vpop.f32.mrb[0].mxu0
        %961 = vdwg.mxu0
        %v962 = vpack.c.bf16 %v819, %v819
        %v963 = vpack.c.bf16 %v865, %v865
        %v964 = vpack.c.bf16 %v911, %v911
        %v965 = vpack.c.bf16 %v957, %v957
        %v966 = vld [vmem:[%s476] sm:$0xf]
        %v967 = vld [vmem:[%s476 + $0x4] sm:$0xf]
        %v968 = vld [vmem:[%s476 + $0x8] sm:$0xf]
        %v969 = vld [vmem:[%s476 + $0xc] sm:$0xf]
        %v970 = vld [vmem:[#allocation15] sm:$0xf]
        %v971 = vld [vmem:[#allocation15 + $0x4] sm:$0xf]
        %v972 = vld [vmem:[#allocation15 + $0x8] sm:$0xf]
        %v973 = vld [vmem:[#allocation15 + $0xc] sm:$0xf]
        %v975 = vsel %vm776, %v966, 0
        %v978 = vsel %vm780, %v970, 0
        %980 = vmatprep.subr.bf16.mxu0 0
        %981 = vmatpush1.bf16.msra.mxu0 %v978
        %982 = vmatprep.subr.bf16.mxu0 0
        %983 = vmatpush1.bf16.msra.mxu0 0
        %984 = vmatprep.subr.bf16.mxu0 0
        %985 = vmatpush1.bf16.msra.mxu0 0
        %986 = vmatprep.subr.bf16.mxu0 0
        %987 = vmatpush1.bf16.msra.mxu0 0
        %988 = vmatprep.subr.bf16.mxu0 0
        %989 = vmatpush1.bf16.msra.mxu0 0
        %990 = vmatprep.subr.bf16.mxu0 0
        %991 = vmatpush1.bf16.msra.mxu0 0
        %992 = vmatprep.subr.bf16.mxu0 0
        %993 = vmatpush1.bf16.msra.mxu0 0
        %994 = vmatprep.subr.bf16.mxu0 0
        %995 = vmatpush1.bf16.msra.mxu0 0
        %996 = vmatprep.subr.bf16.mxu0 0
        %997 = vmatpush1.bf16.msra.mxu0 0
        %998 = vmatprep.subr.bf16.mxu0 0
        %999 = vmatpush1.bf16.msra.mxu0 0
        %1000 = vmatprep.subr.bf16.mxu0 0
        %1001 = vmatpush1.bf16.msra.mxu0 0
        %1002 = vmatprep.subr.bf16.mxu0 0
        %1003 = vmatpush1.bf16.msra.mxu0 0
        %1004 = vmatprep.subr.bf16.mxu0 0
        %1005 = vmatpush1.bf16.msra.mxu0 0
        %1006 = vmatprep.subr.bf16.mxu0 0
        %1007 = vmatpush1.bf16.msra.mxu0 0
        %1008 = vmatprep.subr.bf16.mxu0 0
        %1009 = vmatpush1.bf16.msra.mxu0 0
        %1010 = vmatprep.subr.bf16.mxu0 0
        %1011 = vmatpush1.bf16.msra.mxu0 0
        %1012 = vmatprep.mubr.bf16.mxu0 0
        %1013 = vmatmul.mubr.bf16.gmra.mrb[0].mxu0 %v975
        %v1014 = vpop.f32.mrb[0].mxu0
        %v1015 = vadd.f32 0.0, %v1014
        %v1016 = vpop.f32.mrb[0].mxu0
        %v1017 = vpop.f32.mrb[0].mxu0
        %v1018 = vpop.f32.mrb[0].mxu0
        %1019 = vdwg.mxu0
        %v1021 = vsel %vm776, %v967, 0
        %v1024 = vsel %vm780, %v971, 0
        %1026 = vmatprep.subr.bf16.mxu0 0
        %1027 = vmatpush1.bf16.msra.mxu0 %v1024
        %1028 = vmatprep.subr.bf16.mxu0 0
        %1029 = vmatpush1.bf16.msra.mxu0 0
        %1030 = vmatprep.subr.bf16.mxu0 0
        %1031 = vmatpush1.bf16.msra.mxu0 0
        %1032 = vmatprep.subr.bf16.mxu0 0
        %1033 = vmatpush1.bf16.msra.mxu0 0
        %1034 = vmatprep.subr.bf16.mxu0 0
        %1035 = vmatpush1.bf16.msra.mxu0 0
        %1036 = vmatprep.subr.bf16.mxu0 0
        %1037 = vmatpush1.bf16.msra.mxu0 0
        %1038 = vmatprep.subr.bf16.mxu0 0
        %1039 = vmatpush1.bf16.msra.mxu0 0
        %1040 = vmatprep.subr.bf16.mxu0 0
        %1041 = vmatpush1.bf16.msra.mxu0 0
        %1042 = vmatprep.subr.bf16.mxu0 0
        %1043 = vmatpush1.bf16.msra.mxu0 0
        %1044 = vmatprep.subr.bf16.mxu0 0
        %1045 = vmatpush1.bf16.msra.mxu0 0
        %1046 = vmatprep.subr.bf16.mxu0 0
        %1047 = vmatpush1.bf16.msra.mxu0 0
        %1048 = vmatprep.subr.bf16.mxu0 0
        %1049 = vmatpush1.bf16.msra.mxu0 0
        %1050 = vmatprep.subr.bf16.mxu0 0
        %1051 = vmatpush1.bf16.msra.mxu0 0
        %1052 = vmatprep.subr.bf16.mxu0 0
        %1053 = vmatpush1.bf16.msra.mxu0 0
        %1054 = vmatprep.subr.bf16.mxu0 0
        %1055 = vmatpush1.bf16.msra.mxu0 0
        %1056 = vmatprep.subr.bf16.mxu0 0
        %1057 = vmatpush1.bf16.msra.mxu0 0
        %1058 = vmatprep.mubr.bf16.mxu0 0
        %1059 = vmatmul.mubr.bf16.gmra.mrb[0].mxu0 %v1021
        %v1060 = vpop.f32.mrb[0].mxu0
        %v1061 = vadd.f32 0.0, %v1060
        %v1062 = vpop.f32.mrb[0].mxu0
        %v1063 = vpop.f32.mrb[0].mxu0
        %v1064 = vpop.f32.mrb[0].mxu0
        %1065 = vdwg.mxu0
        %v1067 = vsel %vm776, %v968, 0
        %v1070 = vsel %vm780, %v972, 0
        %1072 = vmatprep.subr.bf16.mxu0 0
        %1073 = vmatpush1.bf16.msra.mxu0 %v1070
        %1074 = vmatprep.subr.bf16.mxu0 0
        %1075 = vmatpush1.bf16.msra.mxu0 0
        %1076 = vmatprep.subr.bf16.mxu0 0
        %1077 = vmatpush1.bf16.msra.mxu0 0
        %1078 = vmatprep.subr.bf16.mxu0 0
        %1079 = vmatpush1.bf16.msra.mxu0 0
        %1080 = vmatprep.subr.bf16.mxu0 0
        %1081 = vmatpush1.bf16.msra.mxu0 0
        %1082 = vmatprep.subr.bf16.mxu0 0
        %1083 = vmatpush1.bf16.msra.mxu0 0
        %1084 = vmatprep.subr.bf16.mxu0 0
        %1085 = vmatpush1.bf16.msra.mxu0 0
        %1086 = vmatprep.subr.bf16.mxu0 0
        %1087 = vmatpush1.bf16.msra.mxu0 0
        %1088 = vmatprep.subr.bf16.mxu0 0
        %1089 = vmatpush1.bf16.msra.mxu0 0
        %1090 = vmatprep.subr.bf16.mxu0 0
        %1091 = vmatpush1.bf16.msra.mxu0 0
        %1092 = vmatprep.subr.bf16.mxu0 0
        %1093 = vmatpush1.bf16.msra.mxu0 0
        %1094 = vmatprep.subr.bf16.mxu0 0
        %1095 = vmatpush1.bf16.msra.mxu0 0
        %1096 = vmatprep.subr.bf16.mxu0 0
        %1097 = vmatpush1.bf16.msra.mxu0 0
        %1098 = vmatprep.subr.bf16.mxu0 0
        %1099 = vmatpush1.bf16.msra.mxu0 0
        %1100 = vmatprep.subr.bf16.mxu0 0
        %1101 = vmatpush1.bf16.msra.mxu0 0
        %1102 = vmatprep.subr.bf16.mxu0 0
        %1103 = vmatpush1.bf16.msra.mxu0 0
        %1104 = vmatprep.mubr.bf16.mxu0 0
        %1105 = vmatmul.mubr.bf16.gmra.mrb[0].mxu0 %v1067
        %v1106 = vpop.f32.mrb[0].mxu0
        %v1107 = vadd.f32 0.0, %v1106
        %v1108 = vpop.f32.mrb[0].mxu0
        %v1109 = vpop.f32.mrb[0].mxu0
        %v1110 = vpop.f32.mrb[0].mxu0
        %1111 = vdwg.mxu0
        %v1113 = vsel %vm776, %v969, 0
        %v1116 = vsel %vm780, %v973, 0
        %1118 = vmatprep.subr.bf16.mxu0 0
        %1119 = vmatpush1.bf16.msra.mxu0 %v1116
        %1120 = vmatprep.subr.bf16.mxu0 0
        %1121 = vmatpush1.bf16.msra.mxu0 0
        %1122 = vmatprep.subr.bf16.mxu0 0
        %1123 = vmatpush1.bf16.msra.mxu0 0
        %1124 = vmatprep.subr.bf16.mxu0 0
        %1125 = vmatpush1.bf16.msra.mxu0 0
        %1126 = vmatprep.subr.bf16.mxu0 0
        %1127 = vmatpush1.bf16.msra.mxu0 0
        %1128 = vmatprep.subr.bf16.mxu0 0
        %1129 = vmatpush1.bf16.msra.mxu0 0
        %1130 = vmatprep.subr.bf16.mxu0 0
        %1131 = vmatpush1.bf16.msra.mxu0 0
        %1132 = vmatprep.subr.bf16.mxu0 0
        %1133 = vmatpush1.bf16.msra.mxu0 0
        %1134 = vmatprep.subr.bf16.mxu0 0
        %1135 = vmatpush1.bf16.msra.mxu0 0
        %1136 = vmatprep.subr.bf16.mxu0 0
        %1137 = vmatpush1.bf16.msra.mxu0 0
        %1138 = vmatprep.subr.bf16.mxu0 0
        %1139 = vmatpush1.bf16.msra.mxu0 0
        %1140 = vmatprep.subr.bf16.mxu0 0
        %1141 = vmatpush1.bf16.msra.mxu0 0
        %1142 = vmatprep.subr.bf16.mxu0 0
        %1143 = vmatpush1.bf16.msra.mxu0 0
        %1144 = vmatprep.subr.bf16.mxu0 0
        %1145 = vmatpush1.bf16.msra.mxu0 0
        %1146 = vmatprep.subr.bf16.mxu0 0
        %1147 = vmatpush1.bf16.msra.mxu0 0
        %1148 = vmatprep.subr.bf16.mxu0 0
        %1149 = vmatpush1.bf16.msra.mxu0 0
        %1150 = vmatprep.mubr.bf16.mxu0 0
        %1151 = vmatmul.mubr.bf16.gmra.mrb[0].mxu0 %v1113
        %v1152 = vpop.f32.mrb[0].mxu0
        %v1153 = vadd.f32 0.0, %v1152
        %v1154 = vpop.f32.mrb[0].mxu0
        %v1155 = vpop.f32.mrb[0].mxu0
        %v1156 = vpop.f32.mrb[0].mxu0
        %1157 = vdwg.mxu0
        %v1158 = vpack.c.bf16 %v1015, %v1015
        %v1159 = vpack.c.bf16 %v1061, %v1061
        %v1160 = vpack.c.bf16 %v1107, %v1107
        %v1161 = vpack.c.bf16 %v1153, %v1153
        %v1162 = vld [vmem:[#allocation2] sm:$0xf]
        %v1163 = vld [vmem:[#allocation2 + $0x4] sm:$0xf]
        %v1164 = vld [vmem:[#allocation2 + $0x8] sm:$0xf]
        %v1165 = vld [vmem:[#allocation2 + $0xc] sm:$0xf]
        %v1167 = vsel %vm776, %v1162, 0
        %v1170 = vsel %vm776, %v962, 0
        %1172 = vmatprep.subr.bf16.mxu0 0
        %1173 = vmatpush1.bf16.xpose.msra.mxu0 %v1170
        %1174 = vmatprep.subr.bf16.mxu0 0
        %1175 = vmatpush1.bf16.xpose.msra.mxu0 0
        %1176 = vmatprep.subr.bf16.mxu0 0
        %1177 = vmatpush1.bf16.xpose.msra.mxu0 0
        %1178 = vmatprep.subr.bf16.mxu0 0
        %1179 = vmatpush1.bf16.xpose.msra.mxu0 0
        %1180 = vmatprep.subr.bf16.mxu0 0
        %1181 = vmatpush1.bf16.xpose.msra.mxu0 0
        %1182 = vmatprep.subr.bf16.mxu0 0
        %1183 = vmatpush1.bf16.xpose.msra.mxu0 0
        %1184 = vmatprep.subr.bf16.mxu0 0
        %1185 = vmatpush1.bf16.xpose.msra.mxu0 0
        %1186 = vmatprep.subr.bf16.mxu0 0
        %1187 = vmatpush1.bf16.xpose.msra.mxu0 0
        %1188 = vmatprep.subr.bf16.mxu0 0
        %1189 = vmatpush1.bf16.xpose.msra.mxu0 0
        %1190 = vmatprep.subr.bf16.mxu0 0
        %1191 = vmatpush1.bf16.xpose.msra.mxu0 0
        %1192 = vmatprep.subr.bf16.mxu0 0
        %1193 = vmatpush1.bf16.xpose.msra.mxu0 0
        %1194 = vmatprep.subr.bf16.mxu0 0
        %1195 = vmatpush1.bf16.xpose.msra.mxu0 0
        %1196 = vmatprep.subr.bf16.mxu0 0
        %1197 = vmatpush1.bf16.xpose.msra.mxu0 0
        %1198 = vmatprep.subr.bf16.mxu0 0
        %1199 = vmatpush1.bf16.xpose.msra.mxu0 0
        %1200 = vmatprep.subr.bf16.mxu0 0
        %1201 = vmatpush1.bf16.xpose.msra.mxu0 0
        %1202 = vmatprep.subr.bf16.mxu0 0
        %1203 = vmatpush1.bf16.xpose.msra.mxu0 0
        %1204 = vmatprep.mubr.bf16.mxu0 0
        %1205 = vmatmul.mubr.bf16.gmra.mrb[0].mxu0 %v1167
        %v1206 = vpop.f32.mrb[0].mxu0
        %v1207 = vadd.f32 0.0, %v1206
        %v1208 = vpop.f32.mrb[0].mxu0
        %v1209 = vpop.f32.mrb[0].mxu0
        %v1210 = vpop.f32.mrb[0].mxu0
        %1211 = vdwg.mxu0
        %v1213 = vsel %vm776, %v1163, 0
        %v1216 = vsel %vm776, %v963, 0
        %1218 = vmatprep.subr.bf16.mxu0 0
        %1219 = vmatpush1.bf16.xpose.msra.mxu0 %v1216
        %1220 = vmatprep.subr.bf16.mxu0 0
        %1221 = vmatpush1.bf16.xpose.msra.mxu0 0
        %1222 = vmatprep.subr.bf16.mxu0 0
        %1223 = vmatpush1.bf16.xpose.msra.mxu0 0
        %1224 = vmatprep.subr.bf16.mxu0 0
        %1225 = vmatpush1.bf16.xpose.msra.mxu0 0
        %1226 = vmatprep.subr.bf16.mxu0 0
        %1227 = vmatpush1.bf16.xpose.msra.mxu0 0
        %1228 = vmatprep.subr.bf16.mxu0 0
        %1229 = vmatpush1.bf16.xpose.msra.mxu0 0
        %1230 = vmatprep.subr.bf16.mxu0 0
        %1231 = vmatpush1.bf16.xpose.msra.mxu0 0
        %1232 = vmatprep.subr.bf16.mxu0 0
        %1233 = vmatpush1.bf16.xpose.msra.mxu0 0
        %1234 = vmatprep.subr.bf16.mxu0 0
        %1235 = vmatpush1.bf16.xpose.msra.mxu0 0
        %1236 = vmatprep.subr.bf16.mxu0 0
        %1237 = vmatpush1.bf16.xpose.msra.mxu0 0
        %1238 = vmatprep.subr.bf16.mxu0 0
        %1239 = vmatpush1.bf16.xpose.msra.mxu0 0
        %1240 = vmatprep.subr.bf16.mxu0 0
        %1241 = vmatpush1.bf16.xpose.msra.mxu0 0
        %1242 = vmatprep.subr.bf16.mxu0 0
        %1243 = vmatpush1.bf16.xpose.msra.mxu0 0
        %1244 = vmatprep.subr.bf16.mxu0 0
        %1245 = vmatpush1.bf16.xpose.msra.mxu0 0
        %1246 = vmatprep.subr.bf16.mxu0 0
        %1247 = vmatpush1.bf16.xpose.msra.mxu0 0
        %1248 = vmatprep.subr.bf16.mxu0 0
        %1249 = vmatpush1.bf16.xpose.msra.mxu0 0
        %1250 = vmatprep.mubr.bf16.mxu0 0
        %1251 = vmatmul.mubr.bf16.gmra.mrb[0].mxu0 %v1213
        %v1252 = vpop.f32.mrb[0].mxu0
        %v1253 = vadd.f32 0.0, %v1252
        %v1254 = vpop.f32.mrb[0].mxu0
        %v1255 = vpop.f32.mrb[0].mxu0
        %v1256 = vpop.f32.mrb[0].mxu0
        %1257 = vdwg.mxu0
        %v1259 = vsel %vm776, %v1164, 0
        %v1262 = vsel %vm776, %v964, 0
        %1264 = vmatprep.subr.bf16.mxu0 0
        %1265 = vmatpush1.bf16.xpose.msra.mxu0 %v1262
        %1266 = vmatprep.subr.bf16.mxu0 0
        %1267 = vmatpush1.bf16.xpose.msra.mxu0 0
        %1268 = vmatprep.subr.bf16.mxu0 0
        %1269 = vmatpush1.bf16.xpose.msra.mxu0 0
        %1270 = vmatprep.subr.bf16.mxu0 0
        %1271 = vmatpush1.bf16.xpose.msra.mxu0 0
        %1272 = vmatprep.subr.bf16.mxu0 0
        %1273 = vmatpush1.bf16.xpose.msra.mxu0 0
        %1274 = vmatprep.subr.bf16.mxu0 0
        %1275 = vmatpush1.bf16.xpose.msra.mxu0 0
        %1276 = vmatprep.subr.bf16.mxu0 0
        %1277 = vmatpush1.bf16.xpose.msra.mxu0 0
        %1278 = vmatprep.subr.bf16.mxu0 0
        %1279 = vmatpush1.bf16.xpose.msra.mxu0 0
        %1280 = vmatprep.subr.bf16.mxu0 0
        %1281 = vmatpush1.bf16.xpose.msra.mxu0 0
        %1282 = vmatprep.subr.bf16.mxu0 0
        %1283 = vmatpush1.bf16.xpose.msra.mxu0 0
        %1284 = vmatprep.subr.bf16.mxu0 0
        %1285 = vmatpush1.bf16.xpose.msra.mxu0 0
        %1286 = vmatprep.subr.bf16.mxu0 0
        %1287 = vmatpush1.bf16.xpose.msra.mxu0 0
        %1288 = vmatprep.subr.bf16.mxu0 0
        %1289 = vmatpush1.bf16.xpose.msra.mxu0 0
        %1290 = vmatprep.subr.bf16.mxu0 0
        %1291 = vmatpush1.bf16.xpose.msra.mxu0 0
        %1292 = vmatprep.subr.bf16.mxu0 0
        %1293 = vmatpush1.bf16.xpose.msra.mxu0 0
        %1294 = vmatprep.subr.bf16.mxu0 0
        %1295 = vmatpush1.bf16.xpose.msra.mxu0 0
        %1296 = vmatprep.mubr.bf16.mxu0 0
        %1297 = vmatmul.mubr.bf16.gmra.mrb[0].mxu0 %v1259
        %v1298 = vpop.f32.mrb[0].mxu0
        %v1299 = vadd.f32 0.0, %v1298
        %v1300 = vpop.f32.mrb[0].mxu0
        %v1301 = vpop.f32.mrb[0].mxu0
        %v1302 = vpop.f32.mrb[0].mxu0
        %1303 = vdwg.mxu0
        %v1305 = vsel %vm776, %v1165, 0
        %v1308 = vsel %vm776, %v965, 0
        %1310 = vmatprep.subr.bf16.mxu0 0
        %1311 = vmatpush1.bf16.xpose.msra.mxu0 %v1308
        %1312 = vmatprep.subr.bf16.mxu0 0
        %1313 = vmatpush1.bf16.xpose.msra.mxu0 0
        %1314 = vmatprep.subr.bf16.mxu0 0
        %1315 = vmatpush1.bf16.xpose.msra.mxu0 0
        %1316 = vmatprep.subr.bf16.mxu0 0
        %1317 = vmatpush1.bf16.xpose.msra.mxu0 0
        %1318 = vmatprep.subr.bf16.mxu0 0
        %1319 = vmatpush1.bf16.xpose.msra.mxu0 0
        %1320 = vmatprep.subr.bf16.mxu0 0
        %1321 = vmatpush1.bf16.xpose.msra.mxu0 0
        %1322 = vmatprep.subr.bf16.mxu0 0
        %1323 = vmatpush1.bf16.xpose.msra.mxu0 0
        %1324 = vmatprep.subr.bf16.mxu0 0
        %1325 = vmatpush1.bf16.xpose.msra.mxu0 0
        %1326 = vmatprep.subr.bf16.mxu0 0
        %1327 = vmatpush1.bf16.xpose.msra.mxu0 0
        %1328 = vmatprep.subr.bf16.mxu0 0
        %1329 = vmatpush1.bf16.xpose.msra.mxu0 0
        %1330 = vmatprep.subr.bf16.mxu0 0
        %1331 = vmatpush1.bf16.xpose.msra.mxu0 0
        %1332 = vmatprep.subr.bf16.mxu0 0
        %1333 = vmatpush1.bf16.xpose.msra.mxu0 0
        %1334 = vmatprep.subr.bf16.mxu0 0
        %1335 = vmatpush1.bf16.xpose.msra.mxu0 0
        %1336 = vmatprep.subr.bf16.mxu0 0
        %1337 = vmatpush1.bf16.xpose.msra.mxu0 0
        %1338 = vmatprep.subr.bf16.mxu0 0
        %1339 = vmatpush1.bf16.xpose.msra.mxu0 0
        %1340 = vmatprep.subr.bf16.mxu0 0
        %1341 = vmatpush1.bf16.xpose.msra.mxu0 0
        %1342 = vmatprep.mubr.bf16.mxu0 0
        %1343 = vmatmul.mubr.bf16.gmra.mrb[0].mxu0 %v1305
        %v1344 = vpop.f32.mrb[0].mxu0
        %v1345 = vadd.f32 0.0, %v1344
        %v1346 = vpop.f32.mrb[0].mxu0
        %v1347 = vpop.f32.mrb[0].mxu0
        %v1348 = vpop.f32.mrb[0].mxu0
        %1349 = vdwg.mxu0
        %v1350 = vld [vmem:[%s485] sm:$0x3]
        %v1351 = vld [vmem:[%s485 + $0x2] sm:$0x3]
        %v1352 = vld [vmem:[%s485 + $0x4] sm:$0x3]
        %v1353 = vld [vmem:[%s485 + $0x6] sm:$0x3]
        %v1354 = vunpack.c.0.s8 %v1350
        %v1355 = vunpack.c.0.s8 %v1351
        %v1356 = vunpack.c.0.s8 %v1352
        %v1357 = vunpack.c.0.s8 %v1353
        %v1358 = vcvt.s32.f32 %v1354
        %v1359 = vcvt.s32.f32 %v1355
        %v1360 = vcvt.s32.f32 %v1356
        %v1361 = vcvt.s32.f32 %v1357
        %vm1362 = vcmp.eq.f32.partialorder %v1358, 0.0
        %vm1363 = vcmp.eq.f32.partialorder %v1359, 0.0
        %vm1364 = vcmp.eq.f32.partialorder %v1360, 0.0
        %vm1365 = vcmp.eq.f32.partialorder %v1361, 0.0
        %v1366 = vsel %vm1362, -1e+20, %v1207
        %v1367 = vsel %vm1363, -1e+20, %v1253
        %v1368 = vsel %vm1364, -1e+20, %v1299
        %v1369 = vsel %vm1365, -1e+20, %v1345
        %v1370 = vld [vmem:[#allocation3] sm:$0xff]
        %v1371 = vld [vmem:[#allocation3 + $0x8] sm:$0xff]
        %v1372 = vld [vmem:[#allocation3 + $0x10] sm:$0xff]
        %v1373 = vld [vmem:[#allocation3 + $0x18] sm:$0xff]
        %v1374 = vsel %vm776, %v1366, -inf
        %1375 = vmax.xlane.f32.xlu0 %v1374
        %v1376 = vpop.xlane.xlu0 %1375
        %v1377 = vsel %vm776, %v1367, -inf
        %1378 = vmax.xlane.f32.xlu0 %v1377
        %v1379 = vpop.xlane.xlu0 %1378
        %v1380 = vsel %vm776, %v1368, -inf
        %1381 = vmax.xlane.f32.xlu0 %v1380
        %v1382 = vpop.xlane.xlu0 %1381
        %v1383 = vsel %vm776, %v1369, -inf
        %1384 = vmax.xlane.f32.xlu0 %v1383
        %v1385 = vpop.xlane.xlu0 %1384
        %v1386 = vmax.f32 %v1370, %v1376
        %v1387 = vmax.f32 %v1371, %v1379
        %v1388 = vmax.f32 %v1372, %v1382
        %v1389 = vmax.f32 %v1373, %v1385
        %v1390 = vsub.f32 %v1370, %v1386
        %v1391 = vsub.f32 %v1371, %v1387
        %v1392 = vsub.f32 %v1372, %v1388
        %v1393 = vsub.f32 %v1373, %v1389
        %v1394 = vmul.f32 %v1390, 1.442695
        %v1395 = vpow.pop %v1394
        %v1396 = vmul.f32 %v1391, 1.442695
        %v1397 = vpow.pop %v1396
        %v1398 = vmul.f32 %v1392, 1.442695
        %v1399 = vpow.pop %v1398
        %v1400 = vmul.f32 %v1393, 1.442695
        %v1401 = vpow.pop %v1400
        %1403 = vset.pattern.permute.xlu0 0
        %1404 = vperm.xlu0 %1403, %v1386
        %v1405 = vpop.permute.xlu0 %1404
        %1408 = vset.pattern.permute.xlu0 0
        %1409 = vperm.xlu0 %1408, %v1387
        %v1410 = vpop.permute.xlu0 %1409
        %1413 = vset.pattern.permute.xlu0 0
        %1414 = vperm.xlu0 %1413, %v1388
        %v1415 = vpop.permute.xlu0 %1414
        %1418 = vset.pattern.permute.xlu0 0
        %1419 = vperm.xlu0 %1418, %v1389
        %v1420 = vpop.permute.xlu0 %1419
        %v1422 = vsub.f32 %v1366, %v1405
        %v1423 = vsub.f32 %v1367, %v1410
        %v1424 = vsub.f32 %v1368, %v1415
        %v1425 = vsub.f32 %v1369, %v1420
        %v1426 = vmul.f32 %v1422, 1.442695
        %v1427 = vpow.pop %v1426
        %v1428 = vmul.f32 %v1423, 1.442695
        %v1429 = vpow.pop %v1428
        %v1430 = vmul.f32 %v1424, 1.442695
        %v1431 = vpow.pop %v1430
        %v1432 = vmul.f32 %v1425, 1.442695
        %v1433 = vpow.pop %v1432
        %v1434 = vld [vmem:[#allocation4] sm:$0xff]
        %v1435 = vld [vmem:[#allocation4 + $0x8] sm:$0xff]
        %v1436 = vld [vmem:[#allocation4 + $0x10] sm:$0xff]
        %v1437 = vld [vmem:[#allocation4 + $0x18] sm:$0xff]
        %v1438 = vmul.f32 %v1395, %v1434
        %v1439 = vmul.f32 %v1397, %v1435
        %v1440 = vmul.f32 %v1399, %v1436
        %v1441 = vmul.f32 %v1401, %v1437
        %v1442 = vsel %vm776, %v1427, 0.0
        %1443 = vadd.xlane.f32.xlu0 %v1442
        %v1444 = vpop.xlane.xlu0 %1443
        %v1445 = vsel %vm776, %v1429, 0.0
        %1446 = vadd.xlane.f32.xlu0 %v1445
        %v1447 = vpop.xlane.xlu0 %1446
        %v1448 = vsel %vm776, %v1431, 0.0
        %1449 = vadd.xlane.f32.xlu0 %v1448
        %v1450 = vpop.xlane.xlu0 %1449
        %v1451 = vsel %vm776, %v1433, 0.0
        %1452 = vadd.xlane.f32.xlu0 %v1451
        %v1453 = vpop.xlane.xlu0 %1452
        %v1454 = vadd.f32 %v1438, %v1444
        %v1455 = vadd.f32 %v1439, %v1447
        %v1456 = vadd.f32 %v1440, %v1450
        %v1457 = vadd.f32 %v1441, %v1453
        %vm1458 = vcmask 7168
        %1459 = vst.msk [vmem:[#allocation4] sm:$0xff] %vm1458, %v1454
        %1460 = vst.msk [vmem:[#allocation4 + $0x8] sm:$0xff] %vm1458, %v1455
        %1461 = vst.msk [vmem:[#allocation4 + $0x10] sm:$0xff] %vm1458, %v1456
        %1462 = vst.msk [vmem:[#allocation4 + $0x18] sm:$0xff] %vm1458, %v1457
        %v1463 = vld [vmem:[#allocation5] sm:$0xff]
        %v1464 = vld [vmem:[#allocation5 + $0x8] sm:$0xff]
        %v1465 = vld [vmem:[#allocation5 + $0x10] sm:$0xff]
        %v1466 = vld [vmem:[#allocation5 + $0x18] sm:$0xff]
        %1468 = vset.pattern.permute.xlu0 0
        %1469 = vperm.xlu0 %1468, %v1395
        %v1470 = vpop.permute.xlu0 %1469
        %1473 = vset.pattern.permute.xlu0 0
        %1474 = vperm.xlu0 %1473, %v1397
        %v1475 = vpop.permute.xlu0 %1474
        %1478 = vset.pattern.permute.xlu0 0
        %1479 = vperm.xlu0 %1478, %v1399
        %v1480 = vpop.permute.xlu0 %1479
        %1483 = vset.pattern.permute.xlu0 0
        %1484 = vperm.xlu0 %1483, %v1401
        %v1485 = vpop.permute.xlu0 %1484
        %v1487 = vmul.f32 %v1470, %v1463
        %v1488 = vmul.f32 %v1475, %v1464
        %v1489 = vmul.f32 %v1480, %v1465
        %v1490 = vmul.f32 %v1485, %v1466
        %v1491 = vpack.c.bf16 %v1427, %v1427
        %v1492 = vpack.c.bf16 %v1429, %v1429
        %v1493 = vpack.c.bf16 %v1431, %v1431
        %v1494 = vpack.c.bf16 %v1433, %v1433
        %v1496 = vsel %vm776, %v1491, 0
        %v1499 = vsel %vm780, %v1158, 0
        %1501 = vmatprep.subr.bf16.mxu0 0
        %1502 = vmatpush1.bf16.msra.mxu0 %v1499
        %1503 = vmatprep.subr.bf16.mxu0 0
        %1504 = vmatpush1.bf16.msra.mxu0 0
        %1505 = vmatprep.subr.bf16.mxu0 0
        %1506 = vmatpush1.bf16.msra.mxu0 0
        %1507 = vmatprep.subr.bf16.mxu0 0
        %1508 = vmatpush1.bf16.msra.mxu0 0
        %1509 = vmatprep.subr.bf16.mxu0 0
        %1510 = vmatpush1.bf16.msra.mxu0 0
        %1511 = vmatprep.subr.bf16.mxu0 0
        %1512 = vmatpush1.bf16.msra.mxu0 0
        %1513 = vmatprep.subr.bf16.mxu0 0
        %1514 = vmatpush1.bf16.msra.mxu0 0
        %1515 = vmatprep.subr.bf16.mxu0 0
        %1516 = vmatpush1.bf16.msra.mxu0 0
        %1517 = vmatprep.subr.bf16.mxu0 0
        %1518 = vmatpush1.bf16.msra.mxu0 0
        %1519 = vmatprep.subr.bf16.mxu0 0
        %1520 = vmatpush1.bf16.msra.mxu0 0
        %1521 = vmatprep.subr.bf16.mxu0 0
        %1522 = vmatpush1.bf16.msra.mxu0 0
        %1523 = vmatprep.subr.bf16.mxu0 0
        %1524 = vmatpush1.bf16.msra.mxu0 0
        %1525 = vmatprep.subr.bf16.mxu0 0
        %1526 = vmatpush1.bf16.msra.mxu0 0
        %1527 = vmatprep.subr.bf16.mxu0 0
        %1528 = vmatpush1.bf16.msra.mxu0 0
        %1529 = vmatprep.subr.bf16.mxu0 0
        %1530 = vmatpush1.bf16.msra.mxu0 0
        %1531 = vmatprep.subr.bf16.mxu0 0
        %1532 = vmatpush1.bf16.msra.mxu0 0
        %1533 = vmatprep.mubr.bf16.mxu0 0
        %1534 = vmatmul.mubr.bf16.gmra.mrb[0].mxu0 %v1496
        %v1535 = vpop.f32.mrb[0].mxu0
        %v1536 = vadd.f32 0.0, %v1535
        %v1537 = vpop.f32.mrb[0].mxu0
        %v1538 = vpop.f32.mrb[0].mxu0
        %v1539 = vpop.f32.mrb[0].mxu0
        %1540 = vdwg.mxu0
        %v1542 = vsel %vm776, %v1492, 0
        %v1545 = vsel %vm780, %v1159, 0
        %1547 = vmatprep.subr.bf16.mxu0 0
        %1548 = vmatpush1.bf16.msra.mxu0 %v1545
        %1549 = vmatprep.subr.bf16.mxu0 0
        %1550 = vmatpush1.bf16.msra.mxu0 0
        %1551 = vmatprep.subr.bf16.mxu0 0
        %1552 = vmatpush1.bf16.msra.mxu0 0
        %1553 = vmatprep.subr.bf16.mxu0 0
        %1554 = vmatpush1.bf16.msra.mxu0 0
        %1555 = vmatprep.subr.bf16.mxu0 0
        %1556 = vmatpush1.bf16.msra.mxu0 0
        %1557 = vmatprep.subr.bf16.mxu0 0
        %1558 = vmatpush1.bf16.msra.mxu0 0
        %1559 = vmatprep.subr.bf16.mxu0 0
        %1560 = vmatpush1.bf16.msra.mxu0 0
        %1561 = vmatprep.subr.bf16.mxu0 0
        %1562 = vmatpush1.bf16.msra.mxu0 0
        %1563 = vmatprep.subr.bf16.mxu0 0
        %1564 = vmatpush1.bf16.msra.mxu0 0
        %1565 = vmatprep.subr.bf16.mxu0 0
        %1566 = vmatpush1.bf16.msra.mxu0 0
        %1567 = vmatprep.subr.bf16.mxu0 0
        %1568 = vmatpush1.bf16.msra.mxu0 0
        %1569 = vmatprep.subr.bf16.mxu0 0
        %1570 = vmatpush1.bf16.msra.mxu0 0
        %1571 = vmatprep.subr.bf16.mxu0 0
        %1572 = vmatpush1.bf16.msra.mxu0 0
        %1573 = vmatprep.subr.bf16.mxu0 0
        %1574 = vmatpush1.bf16.msra.mxu0 0
        %1575 = vmatprep.subr.bf16.mxu0 0
        %1576 = vmatpush1.bf16.msra.mxu0 0
        %1577 = vmatprep.subr.bf16.mxu0 0
        %1578 = vmatpush1.bf16.msra.mxu0 0
        %1579 = vmatprep.mubr.bf16.mxu0 0
        %1580 = vmatmul.mubr.bf16.gmra.mrb[0].mxu0 %v1542
        %v1581 = vpop.f32.mrb[0].mxu0
        %v1582 = vadd.f32 0.0, %v1581
        %v1583 = vpop.f32.mrb[0].mxu0
        %v1584 = vpop.f32.mrb[0].mxu0
        %v1585 = vpop.f32.mrb[0].mxu0
        %1586 = vdwg.mxu0
        %v1588 = vsel %vm776, %v1493, 0
        %v1591 = vsel %vm780, %v1160, 0
        %1593 = vmatprep.subr.bf16.mxu0 0
        %1594 = vmatpush1.bf16.msra.mxu0 %v1591
        %1595 = vmatprep.subr.bf16.mxu0 0
        %1596 = vmatpush1.bf16.msra.mxu0 0
        %1597 = vmatprep.subr.bf16.mxu0 0
        %1598 = vmatpush1.bf16.msra.mxu0 0
        %1599 = vmatprep.subr.bf16.mxu0 0
        %1600 = vmatpush1.bf16.msra.mxu0 0
        %1601 = vmatprep.subr.bf16.mxu0 0
        %1602 = vmatpush1.bf16.msra.mxu0 0
        %1603 = vmatprep.subr.bf16.mxu0 0
        %1604 = vmatpush1.bf16.msra.mxu0 0
        %1605 = vmatprep.subr.bf16.mxu0 0
        %1606 = vmatpush1.bf16.msra.mxu0 0
        %1607 = vmatprep.subr.bf16.mxu0 0
        %1608 = vmatpush1.bf16.msra.mxu0 0
        %1609 = vmatprep.subr.bf16.mxu0 0
        %1610 = vmatpush1.bf16.msra.mxu0 0
        %1611 = vmatprep.subr.bf16.mxu0 0
        %1612 = vmatpush1.bf16.msra.mxu0 0
        %1613 = vmatprep.subr.bf16.mxu0 0
        %1614 = vmatpush1.bf16.msra.mxu0 0
        %1615 = vmatprep.subr.bf16.mxu0 0
        %1616 = vmatpush1.bf16.msra.mxu0 0
        %1617 = vmatprep.subr.bf16.mxu0 0
        %1618 = vmatpush1.bf16.msra.mxu0 0
        %1619 = vmatprep.subr.bf16.mxu0 0
        %1620 = vmatpush1.bf16.msra.mxu0 0
        %1621 = vmatprep.subr.bf16.mxu0 0
        %1622 = vmatpush1.bf16.msra.mxu0 0
        %1623 = vmatprep.subr.bf16.mxu0 0
        %1624 = vmatpush1.bf16.msra.mxu0 0
        %1625 = vmatprep.mubr.bf16.mxu0 0
        %1626 = vmatmul.mubr.bf16.gmra.mrb[0].mxu0 %v1588
        %v1627 = vpop.f32.mrb[0].mxu0
        %v1628 = vadd.f32 0.0, %v1627
        %v1629 = vpop.f32.mrb[0].mxu0
        %v1630 = vpop.f32.mrb[0].mxu0
        %v1631 = vpop.f32.mrb[0].mxu0
        %1632 = vdwg.mxu0
        %v1634 = vsel %vm776, %v1494, 0
        %v1637 = vsel %vm780, %v1161, 0
        %1639 = vmatprep.subr.bf16.mxu0 0
        %1640 = vmatpush1.bf16.msra.mxu0 %v1637
        %1641 = vmatprep.subr.bf16.mxu0 0
        %1642 = vmatpush1.bf16.msra.mxu0 0
        %1643 = vmatprep.subr.bf16.mxu0 0
        %1644 = vmatpush1.bf16.msra.mxu0 0
        %1645 = vmatprep.subr.bf16.mxu0 0
        %1646 = vmatpush1.bf16.msra.mxu0 0
        %1647 = vmatprep.subr.bf16.mxu0 0
        %1648 = vmatpush1.bf16.msra.mxu0 0
        %1649 = vmatprep.subr.bf16.mxu0 0
        %1650 = vmatpush1.bf16.msra.mxu0 0
        %1651 = vmatprep.subr.bf16.mxu0 0
        %1652 = vmatpush1.bf16.msra.mxu0 0
        %1653 = vmatprep.subr.bf16.mxu0 0
        %1654 = vmatpush1.bf16.msra.mxu0 0
        %1655 = vmatprep.subr.bf16.mxu0 0
        %1656 = vmatpush1.bf16.msra.mxu0 0
        %1657 = vmatprep.subr.bf16.mxu0 0
        %1658 = vmatpush1.bf16.msra.mxu0 0
        %1659 = vmatprep.subr.bf16.mxu0 0
        %1660 = vmatpush1.bf16.msra.mxu0 0
        %1661 = vmatprep.subr.bf16.mxu0 0
        %1662 = vmatpush1.bf16.msra.mxu0 0
        %1663 = vmatprep.subr.bf16.mxu0 0
        %1664 = vmatpush1.bf16.msra.mxu0 0
        %1665 = vmatprep.subr.bf16.mxu0 0
        %1666 = vmatpush1.bf16.msra.mxu0 0
        %1667 = vmatprep.subr.bf16.mxu0 0
        %1668 = vmatpush1.bf16.msra.mxu0 0
        %1669 = vmatprep.subr.bf16.mxu0 0
        %1670 = vmatpush1.bf16.msra.mxu0 0
        %1671 = vmatprep.mubr.bf16.mxu0 0
        %1672 = vmatmul.mubr.bf16.gmra.mrb[0].mxu0 %v1634
        %v1673 = vpop.f32.mrb[0].mxu0
        %v1674 = vadd.f32 0.0, %v1673
        %v1675 = vpop.f32.mrb[0].mxu0
        %v1676 = vpop.f32.mrb[0].mxu0
        %v1677 = vpop.f32.mrb[0].mxu0
        %1678 = vdwg.mxu0
        %v1679 = vadd.f32 %v1487, %v1536
        %v1680 = vadd.f32 %v1488, %v1582
        %v1681 = vadd.f32 %v1489, %v1628
        %v1682 = vadd.f32 %v1490, %v1674
        %1683 = vst.msk [vmem:[#allocation5] sm:$0xff] %vm776, %v1679
        %1684 = vst.msk [vmem:[#allocation5 + $0x8] sm:$0xff] %vm776, %v1680
        %1685 = vst.msk [vmem:[#allocation5 + $0x10] sm:$0xff] %vm776, %v1681
        %1686 = vst.msk [vmem:[#allocation5 + $0x18] sm:$0xff] %vm776, %v1682
        %1687 = vst.msk [vmem:[#allocation3] sm:$0xff] %vm1458, %v1386
        %1688 = vst.msk [vmem:[#allocation3 + $0x8] sm:$0xff] %vm1458, %v1387
        %1689 = vst.msk [vmem:[#allocation3 + $0x10] sm:$0xff] %vm1458, %v1388
        %1690 = vst.msk [vmem:[#allocation3 + $0x18] sm:$0xff] %vm1458, %v1389
        // Predicated region
        $region89: #{tpu_custom_call.1} parent=55 // pred_check
          %p1691 = pneg %p548
        $region90: #{tpu_custom_call.1} parent=55 // pred_check_branch
          %1693 = sbr.rel (%p1691) target = $region92
        $region91: #{tpu_custom_call.1} parent=55 // pred_region
          %v1694 = vld [vmem:[#allocation4] sm:$0xff]
          %v1695 = vld [vmem:[#allocation4 + $0x8] sm:$0xff]
          %v1696 = vld [vmem:[#allocation4 + $0x10] sm:$0xff]
          %v1697 = vld [vmem:[#allocation4 + $0x18] sm:$0xff]
          %v1698 = vrcp.pop %v1694
          %v1699 = vrcp.pop %v1695
          %v1700 = vrcp.pop %v1696
          %v1701 = vrcp.pop %v1697
          %v1702 = vld [vmem:[#allocation5] sm:$0xff]
          %v1703 = vld [vmem:[#allocation5 + $0x8] sm:$0xff]
          %v1704 = vld [vmem:[#allocation5 + $0x10] sm:$0xff]
          %v1705 = vld [vmem:[#allocation5 + $0x18] sm:$0xff]
          %1707 = vset.pattern.permute.xlu0 0
          %1708 = vperm.xlu0 %1707, %v1698
          %v1709 = vpop.permute.xlu0 %1708
          %1712 = vset.pattern.permute.xlu0 0
          %1713 = vperm.xlu0 %1712, %v1699
          %v1714 = vpop.permute.xlu0 %1713
          %1717 = vset.pattern.permute.xlu0 0
          %1718 = vperm.xlu0 %1717, %v1700
          %v1719 = vpop.permute.xlu0 %1718
          %1722 = vset.pattern.permute.xlu0 0
          %1723 = vperm.xlu0 %1722, %v1701
          %v1724 = vpop.permute.xlu0 %1723
          %v1726 = vmul.f32 %v1702, %v1709
          %v1727 = vmul.f32 %v1703, %v1714
          %v1728 = vmul.f32 %v1704, %v1719
          %v1729 = vmul.f32 %v1705, %v1724
          %v1730 = vpack.c.bf16 %v1726, %v1726
          %v1731 = vpack.c.bf16 %v1727, %v1727
          %v1732 = vpack.c.bf16 %v1728, %v1728
          %v1733 = vpack.c.bf16 %v1729, %v1729
          %v1734 = vld [vmem:[#allocation17] sm:$0xf]
          %v1735 = vld [vmem:[#allocation17 + $0x4] sm:$0xf]
          %v1736 = vld [vmem:[#allocation17 + $0x8] sm:$0xf]
          %v1737 = vld [vmem:[#allocation17 + $0xc] sm:$0xf]
          %v1739 = vsel %vm776, %v1730, 0
          %v1742 = vsel %vm780, %v1734, 0
          %1744 = vmatprep.subr.bf16.mxu0 0
          %1745 = vmatpush1.bf16.msra.mxu0 %v1742
          %1746 = vmatprep.subr.bf16.mxu0 0
          %1747 = vmatpush1.bf16.msra.mxu0 0
          %1748 = vmatprep.subr.bf16.mxu0 0
          %1749 = vmatpush1.bf16.msra.mxu0 0
          %1750 = vmatprep.subr.bf16.mxu0 0
          %1751 = vmatpush1.bf16.msra.mxu0 0
          %1752 = vmatprep.subr.bf16.mxu0 0
          %1753 = vmatpush1.bf16.msra.mxu0 0
          %1754 = vmatprep.subr.bf16.mxu0 0
          %1755 = vmatpush1.bf16.msra.mxu0 0
          %1756 = vmatprep.subr.bf16.mxu0 0
          %1757 = vmatpush1.bf16.msra.mxu0 0
          %1758 = vmatprep.subr.bf16.mxu0 0
          %1759 = vmatpush1.bf16.msra.mxu0 0
          %1760 = vmatprep.subr.bf16.mxu0 0
          %1761 = vmatpush1.bf16.msra.mxu0 0
          %1762 = vmatprep.subr.bf16.mxu0 0
          %1763 = vmatpush1.bf16.msra.mxu0 0
          %1764 = vmatprep.subr.bf16.mxu0 0
          %1765 = vmatpush1.bf16.msra.mxu0 0
          %1766 = vmatprep.subr.bf16.mxu0 0
          %1767 = vmatpush1.bf16.msra.mxu0 0
          %1768 = vmatprep.subr.bf16.mxu0 0
          %1769 = vmatpush1.bf16.msra.mxu0 0
          %1770 = vmatprep.subr.bf16.mxu0 0
          %1771 = vmatpush1.bf16.msra.mxu0 0
          %1772 = vmatprep.subr.bf16.mxu0 0
          %1773 = vmatpush1.bf16.msra.mxu0 0
          %1774 = vmatprep.subr.bf16.mxu0 0
          %1775 = vmatpush1.bf16.msra.mxu0 0
          %1776 = vmatprep.mubr.bf16.mxu0 0
          %1777 = vmatmul.mubr.bf16.gmra.mrb[0].mxu0 %v1739
          %v1778 = vpop.f32.mrb[0].mxu0
          %v1779 = vadd.f32 0.0, %v1778
          %v1780 = vpop.f32.mrb[0].mxu0
          %v1781 = vpop.f32.mrb[0].mxu0
          %v1782 = vpop.f32.mrb[0].mxu0
          %1783 = vdwg.mxu0
          %v1785 = vsel %vm776, %v1731, 0
          %v1788 = vsel %vm780, %v1735, 0
          %1790 = vmatprep.subr.bf16.mxu0 0
          %1791 = vmatpush1.bf16.msra.mxu0 %v1788
          %1792 = vmatprep.subr.bf16.mxu0 0
          %1793 = vmatpush1.bf16.msra.mxu0 0
          %1794 = vmatprep.subr.bf16.mxu0 0
          %1795 = vmatpush1.bf16.msra.mxu0 0
          %1796 = vmatprep.subr.bf16.mxu0 0
          %1797 = vmatpush1.bf16.msra.mxu0 0
          %1798 = vmatprep.subr.bf16.mxu0 0
          %1799 = vmatpush1.bf16.msra.mxu0 0
          %1800 = vmatprep.subr.bf16.mxu0 0
          %1801 = vmatpush1.bf16.msra.mxu0 0
          %1802 = vmatprep.subr.bf16.mxu0 0
          %1803 = vmatpush1.bf16.msra.mxu0 0
          %1804 = vmatprep.subr.bf16.mxu0 0
          %1805 = vmatpush1.bf16.msra.mxu0 0
          %1806 = vmatprep.subr.bf16.mxu0 0
          %1807 = vmatpush1.bf16.msra.mxu0 0
          %1808 = vmatprep.subr.bf16.mxu0 0
          %1809 = vmatpush1.bf16.msra.mxu0 0
          %1810 = vmatprep.subr.bf16.mxu0 0
          %1811 = vmatpush1.bf16.msra.mxu0 0
          %1812 = vmatprep.subr.bf16.mxu0 0
          %1813 = vmatpush1.bf16.msra.mxu0 0
          %1814 = vmatprep.subr.bf16.mxu0 0
          %1815 = vmatpush1.bf16.msra.mxu0 0
          %1816 = vmatprep.subr.bf16.mxu0 0
          %1817 = vmatpush1.bf16.msra.mxu0 0
          %1818 = vmatprep.subr.bf16.mxu0 0
          %1819 = vmatpush1.bf16.msra.mxu0 0
          %1820 = vmatprep.subr.bf16.mxu0 0
          %1821 = vmatpush1.bf16.msra.mxu0 0
          %1822 = vmatprep.mubr.bf16.mxu0 0
          %1823 = vmatmul.mubr.bf16.gmra.mrb[0].mxu0 %v1785
          %v1824 = vpop.f32.mrb[0].mxu0
          %v1825 = vadd.f32 0.0, %v1824
          %v1826 = vpop.f32.mrb[0].mxu0
          %v1827 = vpop.f32.mrb[0].mxu0
          %v1828 = vpop.f32.mrb[0].mxu0
          %1829 = vdwg.mxu0
          %v1831 = vsel %vm776, %v1732, 0
          %v1834 = vsel %vm780, %v1736, 0
          %1836 = vmatprep.subr.bf16.mxu0 0
          %1837 = vmatpush1.bf16.msra.mxu0 %v1834
          %1838 = vmatprep.subr.bf16.mxu0 0
          %1839 = vmatpush1.bf16.msra.mxu0 0
          %1840 = vmatprep.subr.bf16.mxu0 0
          %1841 = vmatpush1.bf16.msra.mxu0 0
          %1842 = vmatprep.subr.bf16.mxu0 0
          %1843 = vmatpush1.bf16.msra.mxu0 0
          %1844 = vmatprep.subr.bf16.mxu0 0
          %1845 = vmatpush1.bf16.msra.mxu0 0
          %1846 = vmatprep.subr.bf16.mxu0 0
          %1847 = vmatpush1.bf16.msra.mxu0 0
          %1848 = vmatprep.subr.bf16.mxu0 0
          %1849 = vmatpush1.bf16.msra.mxu0 0
          %1850 = vmatprep.subr.bf16.mxu0 0
          %1851 = vmatpush1.bf16.msra.mxu0 0
          %1852 = vmatprep.subr.bf16.mxu0 0
          %1853 = vmatpush1.bf16.msra.mxu0 0
          %1854 = vmatprep.subr.bf16.mxu0 0
          %1855 = vmatpush1.bf16.msra.mxu0 0
          %1856 = vmatprep.subr.bf16.mxu0 0
          %1857 = vmatpush1.bf16.msra.mxu0 0
          %1858 = vmatprep.subr.bf16.mxu0 0
          %1859 = vmatpush1.bf16.msra.mxu0 0
          %1860 = vmatprep.subr.bf16.mxu0 0
          %1861 = vmatpush1.bf16.msra.mxu0 0
          %1862 = vmatprep.subr.bf16.mxu0 0
          %1863 = vmatpush1.bf16.msra.mxu0 0
          %1864 = vmatprep.subr.bf16.mxu0 0
          %1865 = vmatpush1.bf16.msra.mxu0 0
          %1866 = vmatprep.subr.bf16.mxu0 0
          %1867 = vmatpush1.bf16.msra.mxu0 0
          %1868 = vmatprep.mubr.bf16.mxu0 0
          %1869 = vmatmul.mubr.bf16.gmra.mrb[0].mxu0 %v1831
          %v1870 = vpop.f32.mrb[0].mxu0
          %v1871 = vadd.f32 0.0, %v1870
          %v1872 = vpop.f32.mrb[0].mxu0
          %v1873 = vpop.f32.mrb[0].mxu0
          %v1874 = vpop.f32.mrb[0].mxu0
          %1875 = vdwg.mxu0
          %v1877 = vsel %vm776, %v1733, 0
          %v1880 = vsel %vm780, %v1737, 0
          %1882 = vmatprep.subr.bf16.mxu0 0
          %1883 = vmatpush1.bf16.msra.mxu0 %v1880
          %1884 = vmatprep.subr.bf16.mxu0 0
          %1885 = vmatpush1.bf16.msra.mxu0 0
          %1886 = vmatprep.subr.bf16.mxu0 0
          %1887 = vmatpush1.bf16.msra.mxu0 0
          %1888 = vmatprep.subr.bf16.mxu0 0
          %1889 = vmatpush1.bf16.msra.mxu0 0
          %1890 = vmatprep.subr.bf16.mxu0 0
          %1891 = vmatpush1.bf16.msra.mxu0 0
          %1892 = vmatprep.subr.bf16.mxu0 0
          %1893 = vmatpush1.bf16.msra.mxu0 0
          %1894 = vmatprep.subr.bf16.mxu0 0
          %1895 = vmatpush1.bf16.msra.mxu0 0
          %1896 = vmatprep.subr.bf16.mxu0 0
          %1897 = vmatpush1.bf16.msra.mxu0 0
          %1898 = vmatprep.subr.bf16.mxu0 0
          %1899 = vmatpush1.bf16.msra.mxu0 0
          %1900 = vmatprep.subr.bf16.mxu0 0
          %1901 = vmatpush1.bf16.msra.mxu0 0
          %1902 = vmatprep.subr.bf16.mxu0 0
          %1903 = vmatpush1.bf16.msra.mxu0 0
          %1904 = vmatprep.subr.bf16.mxu0 0
          %1905 = vmatpush1.bf16.msra.mxu0 0
          %1906 = vmatprep.subr.bf16.mxu0 0
          %1907 = vmatpush1.bf16.msra.mxu0 0
          %1908 = vmatprep.subr.bf16.mxu0 0
          %1909 = vmatpush1.bf16.msra.mxu0 0
          %1910 = vmatprep.subr.bf16.mxu0 0
          %1911 = vmatpush1.bf16.msra.mxu0 0
          %1912 = vmatprep.subr.bf16.mxu0 0
          %1913 = vmatpush1.bf16.msra.mxu0 0
          %1914 = vmatprep.mubr.bf16.mxu0 0
          %1915 = vmatmul.mubr.bf16.gmra.mrb[0].mxu0 %v1877
          %v1916 = vpop.f32.mrb[0].mxu0
          %v1917 = vadd.f32 0.0, %v1916
          %v1918 = vpop.f32.mrb[0].mxu0
          %v1919 = vpop.f32.mrb[0].mxu0
          %v1920 = vpop.f32.mrb[0].mxu0
          %1921 = vdwg.mxu0
          %vm1922 = vcmask 261120
          %v1923 = vsel %vm1922, %v1779, 0.0
          %v1924 = vsel %vm1922, %v1825, 0.0
          %v1925 = vadd.f32 %v1923, %v1924
          %v1926 = vsel %vm1922, %v1871, 0.0
          %v1927 = vadd.f32 %v1925, %v1926
          %v1928 = vsel %vm1922, %v1917, 0.0
          %v1929 = vadd.f32 %v1927, %v1928
          %v1930 = vld [vmem:[%s8] sm:$0x1]
          %v1932 = vlaneseq
          %v1933 = vshrl.u32 %v1932, 7
          %v1934 = vsub.s32 0, %v1933
          %v1935 = vrot.slane %v1930, %v1934
          %v1937 = vadd.f32 %v1929, %v1935
          %v1938 = vpack.c.bf16 %v1937, %v1937
          %vm1939 = vcmask 257024
          %1940 = vst.msk [vmem:[%s546] sm:$0xf] %vm1939, %v1938
        $region92: #{tpu_custom_call.1} parent=55 // pred_fallthru
          _
        %s1941 = sand.u32 %s281, 1
        %s1942 = scalar_lea.sflag [#allocation8], %s1941
        %s1943 = sand.u32 %s281, 1
        %s1944 = smul.addr %s1943, 4
        %s1945 = scalar_lea.vmem [#allocation18], %s1944
        // Predicated region
        $region93: #{tpu_custom_call.1} parent=55 // pred_check
          %p1946 = pneg %p291
        $region94: #{tpu_custom_call.1} parent=55 // pred_check_branch
          %1948 = sbr.rel (%p1946) target = $region96
        $region95: #{tpu_custom_call.1} parent=55 // pred_region
          %s1950 = ssub.s32 64, 64
          %1951 = vsyncadd %s1942, %s1950
          %s1952 = sadd.s32 %s39, %s38
          %s1953 = smul.addr %s1952, 64
          %s1954 = scalar_lea.hbm %s9, %s1953
          %s1956 = sshll.u32 %s1945, 4
          %s1957 = int_to_ptr.vmem [resolvable:$true] %s1956
          %1959 = dma.vmem_to_hbm [thread:$0]  %s1957, 64, %s1954, %s1942
        $region96: #{tpu_custom_call.1} parent=55 // pred_fallthru
          _
      $region56: #{tpu_custom_call.1} parent=5 // pred_fallthru
        _
      %p1960 = scmp.le.s32.totalorder 2, %s28
      // Predicated region
      $region97: #{tpu_custom_call.1} parent=5 // pred_check
        %p1961 = pneg %p1960
      $region98: #{tpu_custom_call.1} parent=5 // pred_check_branch
        %1963 = sbr.rel (%p1961) target = $region100
      $region99: #{tpu_custom_call.1} parent=5 // pred_region
        %s1964 = ssub.s32 %s28, 2
        // Predicated region
        $region101: #{tpu_custom_call.1} parent=99 // pred_check
          %p1965 = pneg %p297
        $region102: #{tpu_custom_call.1} parent=99 // pred_check_branch
          %1967 = sbr.rel (%p1965) target = $region104
        $region103: #{tpu_custom_call.1} parent=99 // pred_region
          %s1968 = sand.u32 %s282, 1
          %s1969 = scalar_lea.sflag [#allocation8], %s1968
          %s1970 = sand.u32 %s282, 1
          %s1971 = smul.addr %s1970, 4
          %s1972 = scalar_lea.vmem [#allocation18], %s1971
          %1973 = dma.done %s1969, 64
        $region104: #{tpu_custom_call.1} parent=99 // pred_fallthru
          _
      $region100: #{tpu_custom_call.1} parent=5 // pred_fallthru
        _
    $region6: #{tpu_custom_call.1} parent=1 // loop_footer
      %s32 = sadd.s32 1, %s28
    $region7: #{tpu_custom_call.1} parent=1 // loop_footer_branch
      %27 = sbr.rel target = $region3
    $region8: #{tpu_custom_call.1} parent=1 // loop_exit
      _
    %1974 = vsyncpa [#allocation7], 1
    %s1975 = scalar_lea.sflag [#allocation7], 1
    %1976 = vsyncpa %s1975, 1
    %1977 = vsyncpa [#allocation10], 1
    %s1978 = scalar_lea.sflag [#allocation10], 1
    %1979 = vsyncpa %s1978, 1
    %1980 = vsyncpa [#allocation13], 1
    %s1981 = scalar_lea.sflag [#allocation13], 1
    %1982 = vsyncpa %s1981, 1
    %1983 = vsyncpa [#allocation16], 1
    %1984 = vsyncpa [#allocation8], 1
    %s1985 = scalar_lea.sflag [#allocation8], 1
    %1986 = vsyncpa %s1985, 1

</llo_original>
